<compile_context>
chip_gen: v7x
topology: tpu7x:2x2x1
jax: 0.10.0
libtpu: 0.0.40
codegen_flags: <defaults>
</compile_context>

<pallas_src>
import functools

import jax
import jax.numpy as jnp
from jax.experimental import pallas as pl
from jax.experimental.pallas import tpu as pltpu


def _round_up(x, m):
    return (x + m - 1) // m * m


def _pick_row_tile(h_out, w_out, target_rows=128):
    """Largest TH dividing h_out with TH*Wout ~ target matmul M dim."""
    max_rows = max(1, min(h_out, target_rows // max(w_out, 1)))
    for th in range(max_rows, 0, -1):
        if h_out % th == 0:
            return th
    return 1


def _conv_bn_relu_kernel(x_ref, w_ref, bias_ref, o_ref, *, stride, th, w_out):
    # x_ref:    (1, Hp, Wp, Cin_p)   padded image (whole image, reused across row tiles)
    # w_ref:    (9, Cin_p, Cout_p)   BN-scale-folded conv weights, bf16
    # bias_ref: (1, Cout_p)          folded BN bias, f32
    # o_ref:    (1, TH, Wout, Cout_p)
    cin = x_ref.shape[-1]
    cout = o_ref.shape[-1]
    rows_needed = (th - 1) * stride + 3      # TH output rows + 2-row halo

    row0 = pl.multiple_of(pl.program_id(1) * (th * stride), th * stride)
    x_win = x_ref[0, pl.ds(row0, rows_needed), :, :]      # (rows, Wp, Cin_p) bf16

    acc = None
    # Direct 3x3 conv: 9 shifted windows, each a lane-dense (TH*Wout,128)@(128,128)
    # MXU matmul accumulated in f32.  First tap initializes the accumulator.
    for kh in range(3):
        for kw in range(3):
            if stride == 1:
                patch = x_win[kh:kh + th, kw:kw + w_out, :]
            else:
                # TODO(synk): for stride=2 an even/odd column phase-split in the
                # wrapper would avoid strided sublane gathers; strided slice kept
                # here for generality (test uses stride=1).
                patch = jax.lax.slice(
                    x_win,
                    (kh, kw, 0),
                    (kh + (th - 1) * stride + 1,
                     kw + (w_out - 1) * stride + 1,
                     cin),
                    (stride, stride, 1))
            patch = patch.reshape(th * w_out, cin)
            tap = jnp.dot(patch, w_ref[kh * 3 + kw],
                          preferred_element_type=jnp.float32)
            acc = tap if acc is None else acc + tap

    # Fused (pre-folded) BatchNorm bias + ReLU epilogue in f32.
    y = jnp.maximum(acc + bias_ref[...], 0.0)
    o_ref[0] = y.reshape(th, w_out, cout).astype(o_ref.dtype)


@functools.partial(jax.jit, static_argnums=(6, 7))
def conv_bn_forward(x_nchw, weight_oihw, gamma, beta, running_mean, running_var,
                    stride=1, eps=1e-5):
    """Equivalent of conv_bn.forward(x) with BatchNorm in eval (running-stats) mode."""
    n, cin, h, w = x_nchw.shape
    cout = weight_oihw.shape[0]
    h_out = (h + 2 - 3) // stride + 1
    w_out = (w + 2 - 3) // stride + 1

    LANE = 128
    cin_p = _round_up(cin, LANE)
    cout_p = _round_up(cout, LANE)

    # --- BN folding (inference, running stats): y = conv(x, w*scale) + bias ---
    scale = gamma / jnp.sqrt(running_var + eps)                      # (Cout,)
    bias = beta - running_mean * scale                               # (Cout,)

    w_hwio = jnp.transpose(weight_oihw, (2, 3, 1, 0)) * scale[None, None, None, :]
    w_hwio = jnp.pad(w_hwio, ((0, 0), (0, 0),
                              (0, cin_p - cin), (0, cout_p - cout)))
    w_folded = w_hwio.astype(jnp.bfloat16).reshape(9, cin_p, cout_p)

    bias_p = jnp.pad(bias, (0, cout_p - cout)).astype(jnp.float32).reshape(1, cout_p)

    # NCHW -> NHWC, bf16, 1-px spatial halo + channel pad to a lane-dense layout.
    x_nhwc = jnp.transpose(x_nchw, (0, 2, 3, 1)).astype(jnp.bfloat16)
    x_pad = jnp.pad(x_nhwc, ((0, 0), (1, 1), (1, 1), (0, cin_p - cin)))

    hp, wp = h + 2, w + 2
    th = _pick_row_tile(h_out, w_out)

    kernel = functools.partial(_conv_bn_relu_kernel,
                               stride=stride, th=th, w_out=w_out)

    out_nhwc = pl.pallas_call(
        kernel,
        out_shape=jax.ShapeDtypeStruct((n, h_out, w_out, cout_p), jnp.float32),
        grid_spec=pltpu.PrefetchScalarGridSpec(
            num_scalar_prefetch=0,
            grid=(n, h_out // th),
            in_specs=[
                pl.BlockSpec((1, hp, wp, cin_p), lambda b, t: (b, 0, 0, 0)),
                pl.BlockSpec((9, cin_p, cout_p), lambda b, t: (0, 0, 0)),
                pl.BlockSpec((1, cout_p), lambda b, t: (0, 0)),
            ],
            out_specs=pl.BlockSpec((1, th, w_out, cout_p),
                                   lambda b, t: (b, t, 0, 0)),
        ),
        compiler_params=pltpu.CompilerParams(
            dimension_semantics=("parallel", "parallel")),
    )(x_pad, w_folded, bias_p)

    # Drop channel padding, back to NCHW.
    return jnp.transpose(out_nhwc[..., :cout], (0, 3, 1, 2))


def _reference(x_nchw, weight_oihw, gamma, beta, running_mean, running_var,
               stride=1, eps=1e-5):
    # Same math with the same bf16 rounding of operands (accumulation in f32),
    # so the comparison isolates kernel correctness from bf16 quantization.
    scale = gamma / jnp.sqrt(running_var + eps)
    bias = beta - running_mean * scale
    w_folded = (weight_oihw * scale[:, None, None, None]).astype(
        jnp.bfloat16).astype(jnp.float32)
    xb = x_nchw.astype(jnp.bfloat16).astype(jnp.float32)
    y = jax.lax.conv_general_dilated(
        xb, w_folded, window_strides=(stride, stride), padding=((1, 1), (1, 1)),
        dimension_numbers=("NCHW", "OIHW", "NCHW"),
        precision=jax.lax.Precision.HIGHEST)
    y = y + bias[None, :, None, None]
    return jnp.maximum(y, 0.0)


if __name__ == "__main__":
    key = jax.random.PRNGKey(0)
    k_x, k_w, k_g, k_b, k_m, k_v = jax.random.split(key, 6)

    N, CIN, COUT, H, W, STRIDE = 2, 4, 8, 16, 16, 1

    x = jax.random.normal(k_x, (N, CIN, H, W), jnp.float32)
    weight = jax.random.normal(k_w, (COUT, CIN, 3, 3), jnp.float32) * 0.1
    gamma = 1.0 + 0.1 * jax.random.normal(k_g, (COUT,), jnp.float32)
    beta = 0.1 * jax.random.normal(k_b, (COUT,), jnp.float32)
    running_mean = 0.1 * jax.random.normal(k_m, (COUT,), jnp.float32)
    running_var = jnp.abs(jax.random.normal(k_v, (COUT,), jnp.float32)) + 0.5

    # TODO(synk): BatchNorm is implemented in eval mode (running stats); PyTorch's
    # fresh module in train mode would use per-batch statistics instead.
    out = conv_bn_forward(x, weight, gamma, beta, running_mean, running_var, STRIDE)
    out = jax.block_until_ready(out)

    ref = _reference(x, weight, gamma, beta, running_mean, running_var, STRIDE)
    assert out.shape == ref.shape == (N, COUT, H, W)
    assert jnp.allclose(out, ref, atol=1e-3, rtol=1e-3), \
        f"max err {jnp.max(jnp.abs(out - ref))}"

    print("KERNEL_OK")
</pallas_src>

<mosaic_0001>
module attributes {stable_mosaic.version = 11 : i64} {
  func.func @_conv_bn_relu_kernel(%arg0: i32, %arg1: i32, %arg2: memref<1x18x18x128xbf16, #tpu.memory_space<vmem>>, %arg3: memref<9x128x128xbf16, #tpu.memory_space<vmem>>, %arg4: memref<1x128xf32, #tpu.memory_space<vmem>>, %arg5: memref<1x8x16x128xf32, #tpu.memory_space<vmem>>) attributes {dimension_semantics = [#tpu.dimension_semantics<parallel>, #tpu.dimension_semantics<parallel>], iteration_bounds = array<i64: 2, 2>, scalar_prefetch = 0 : i64, scratch_operands = 0 : i64, tpu.core_type = #tpu.core_type<tc>, window_params = [{transform_indices = @transform_0, window_bounds = array<i64: 1, 18, 18, 128>}, {pipeline_mode = #tpu.pipeline_mode<synchronous>, transform_indices = @transform_1, window_bounds = array<i64: 9, 128, 128>}, {pipeline_mode = #tpu.pipeline_mode<synchronous>, transform_indices = @transform_2, window_bounds = array<i64: 1, 128>}, {transform_indices = @transform_3, window_bounds = array<i64: 1, 8, 16, 128>}]} {
    %c8_i32 = arith.constant 8 : i32
    %0 = arith.muli %arg1, %c8_i32 : i32
    %1 = tpu.assume_multiple %0, 8 : i32
    %c0 = arith.constant 0 : index
    %2 = arith.index_cast %1 : i32 to index
    %c0_0 = arith.constant 0 : index
    %c0_1 = arith.constant 0 : index
    %3 = vector.load %arg2[%c0, %2, %c0_0, %c0_1] : memref<1x18x18x128xbf16, #tpu.memory_space<vmem>>, vector<1x10x18x128xbf16>
    %4 = vector.shape_cast %3 : vector<1x10x18x128xbf16> to vector<10x18x128xbf16>
    %5 = vector.extract_strided_slice %4 {offsets = [0, 0, 0], sizes = [8, 16, 128], strides = [1, 1, 1]} : vector<10x18x128xbf16> to vector<8x16x128xbf16>
    %6 = vector.shape_cast %5 : vector<8x16x128xbf16> to vector<128x128xbf16>
    %c0_2 = arith.constant 0 : index
    %c0_3 = arith.constant 0 : index
    %c0_4 = arith.constant 0 : index
    %7 = vector.load %arg3[%c0_2, %c0_3, %c0_4] : memref<9x128x128xbf16, #tpu.memory_space<vmem>>, vector<1x128x128xbf16>
    %8 = vector.shape_cast %7 : vector<1x128x128xbf16> to vector<128x128xbf16>
    %cst = arith.constant dense<0.000000e+00> : vector<128x128xf32>
    %9 = tpu.matmul %6, %8, %cst {dimension_numbers = #tpu.dot_dimension_numbers<[1], [0], [0], [1], [0, 0, 1, 1], [], []>} : vector<128x128xbf16>, vector<128x128xbf16>, vector<128x128xf32> -> vector<128x128xf32>
    %10 = vector.extract_strided_slice %4 {offsets = [0, 1, 0], sizes = [8, 16, 128], strides = [1, 1, 1]} : vector<10x18x128xbf16> to vector<8x16x128xbf16>
    %11 = vector.shape_cast %10 : vector<8x16x128xbf16> to vector<128x128xbf16>
    %c1 = arith.constant 1 : index
    %c0_5 = arith.constant 0 : index
    %c0_6 = arith.constant 0 : index
    %12 = vector.load %arg3[%c1, %c0_5, %c0_6] : memref<9x128x128xbf16, #tpu.memory_space<vmem>>, vector<1x128x128xbf16>
    %13 = vector.shape_cast %12 : vector<1x128x128xbf16> to vector<128x128xbf16>
    %cst_7 = arith.constant dense<0.000000e+00> : vector<128x128xf32>
    %14 = tpu.matmul %11, %13, %cst_7 {dimension_numbers = #tpu.dot_dimension_numbers<[1], [0], [0], [1], [0, 0, 1, 1], [], []>} : vector<128x128xbf16>, vector<128x128xbf16>, vector<128x128xf32> -> vector<128x128xf32>
    %15 = arith.addf %9, %14 : vector<128x128xf32>
    %16 = vector.extract_strided_slice %4 {offsets = [0, 2, 0], sizes = [8, 16, 128], strides = [1, 1, 1]} : vector<10x18x128xbf16> to vector<8x16x128xbf16>
    %17 = vector.shape_cast %16 : vector<8x16x128xbf16> to vector<128x128xbf16>
    %c2 = arith.constant 2 : index
    %c0_8 = arith.constant 0 : index
    %c0_9 = arith.constant 0 : index
    %18 = vector.load %arg3[%c2, %c0_8, %c0_9] : memref<9x128x128xbf16, #tpu.memory_space<vmem>>, vector<1x128x128xbf16>
    %19 = vector.shape_cast %18 : vector<1x128x128xbf16> to vector<128x128xbf16>
    %cst_10 = arith.constant dense<0.000000e+00> : vector<128x128xf32>
    %20 = tpu.matmul %17, %19, %cst_10 {dimension_numbers = #tpu.dot_dimension_numbers<[1], [0], [0], [1], [0, 0, 1, 1], [], []>} : vector<128x128xbf16>, vector<128x128xbf16>, vector<128x128xf32> -> vector<128x128xf32>
    %21 = arith.addf %15, %20 : vector<128x128xf32>
    %22 = vector.extract_strided_slice %4 {offsets = [1, 0, 0], sizes = [8, 16, 128], strides = [1, 1, 1]} : vector<10x18x128xbf16> to vector<8x16x128xbf16>
    %23 = vector.shape_cast %22 : vector<8x16x128xbf16> to vector<128x128xbf16>
    %c3 = arith.constant 3 : index
    %c0_11 = arith.constant 0 : index
    %c0_12 = arith.constant 0 : index
    %24 = vector.load %arg3[%c3, %c0_11, %c0_12] : memref<9x128x128xbf16, #tpu.memory_space<vmem>>, vector<1x128x128xbf16>
    %25 = vector.shape_cast %24 : vector<1x128x128xbf16> to vector<128x128xbf16>
    %cst_13 = arith.constant dense<0.000000e+00> : vector<128x128xf32>
    %26 = tpu.matmul %23, %25, %cst_13 {dimension_numbers = #tpu.dot_dimension_numbers<[1], [0], [0], [1], [0, 0, 1, 1], [], []>} : vector<128x128xbf16>, vector<128x128xbf16>, vector<128x128xf32> -> vector<128x128xf32>
    %27 = arith.addf %21, %26 : vector<128x128xf32>
    %28 = vector.extract_strided_slice %4 {offsets = [1, 1, 0], sizes = [8, 16, 128], strides = [1, 1, 1]} : vector<10x18x128xbf16> to vector<8x16x128xbf16>
    %29 = vector.shape_cast %28 : vector<8x16x128xbf16> to vector<128x128xbf16>
    %c4 = arith.constant 4 : index
    %c0_14 = arith.constant 0 : index
    %c0_15 = arith.constant 0 : index
    %30 = vector.load %arg3[%c4, %c0_14, %c0_15] : memref<9x128x128xbf16, #tpu.memory_space<vmem>>, vector<1x128x128xbf16>
    %31 = vector.shape_cast %30 : vector<1x128x128xbf16> to vector<128x128xbf16>
    %cst_16 = arith.constant dense<0.000000e+00> : vector<128x128xf32>
    %32 = tpu.matmul %29, %31, %cst_16 {dimension_numbers = #tpu.dot_dimension_numbers<[1], [0], [0], [1], [0, 0, 1, 1], [], []>} : vector<128x128xbf16>, vector<128x128xbf16>, vector<128x128xf32> -> vector<128x128xf32>
    %33 = arith.addf %27, %32 : vector<128x128xf32>
    %34 = vector.extract_strided_slice %4 {offsets = [1, 2, 0], sizes = [8, 16, 128], strides = [1, 1, 1]} : vector<10x18x128xbf16> to vector<8x16x128xbf16>
    %35 = vector.shape_cast %34 : vector<8x16x128xbf16> to vector<128x128xbf16>
    %c5 = arith.constant 5 : index
    %c0_17 = arith.constant 0 : index
    %c0_18 = arith.constant 0 : index
    %36 = vector.load %arg3[%c5, %c0_17, %c0_18] : memref<9x128x128xbf16, #tpu.memory_space<vmem>>, vector<1x128x128xbf16>
    %37 = vector.shape_cast %36 : vector<1x128x128xbf16> to vector<128x128xbf16>
    %cst_19 = arith.constant dense<0.000000e+00> : vector<128x128xf32>
    %38 = tpu.matmul %35, %37, %cst_19 {dimension_numbers = #tpu.dot_dimension_numbers<[1], [0], [0], [1], [0, 0, 1, 1], [], []>} : vector<128x128xbf16>, vector<128x128xbf16>, vector<128x128xf32> -> vector<128x128xf32>
    %39 = arith.addf %33, %38 : vector<128x128xf32>
    %40 = vector.extract_strided_slice %4 {offsets = [2, 0, 0], sizes = [8, 16, 128], strides = [1, 1, 1]} : vector<10x18x128xbf16> to vector<8x16x128xbf16>
    %41 = vector.shape_cast %40 : vector<8x16x128xbf16> to vector<128x128xbf16>
    %c6 = arith.constant 6 : index
    %c0_20 = arith.constant 0 : index
    %c0_21 = arith.constant 0 : index
    %42 = vector.load %arg3[%c6, %c0_20, %c0_21] : memref<9x128x128xbf16, #tpu.memory_space<vmem>>, vector<1x128x128xbf16>
    %43 = vector.shape_cast %42 : vector<1x128x128xbf16> to vector<128x128xbf16>
    %cst_22 = arith.constant dense<0.000000e+00> : vector<128x128xf32>
    %44 = tpu.matmul %41, %43, %cst_22 {dimension_numbers = #tpu.dot_dimension_numbers<[1], [0], [0], [1], [0, 0, 1, 1], [], []>} : vector<128x128xbf16>, vector<128x128xbf16>, vector<128x128xf32> -> vector<128x128xf32>
    %45 = arith.addf %39, %44 : vector<128x128xf32>
    %46 = vector.extract_strided_slice %4 {offsets = [2, 1, 0], sizes = [8, 16, 128], strides = [1, 1, 1]} : vector<10x18x128xbf16> to vector<8x16x128xbf16>
    %47 = vector.shape_cast %46 : vector<8x16x128xbf16> to vector<128x128xbf16>
    %c7 = arith.constant 7 : index
    %c0_23 = arith.constant 0 : index
    %c0_24 = arith.constant 0 : index
    %48 = vector.load %arg3[%c7, %c0_23, %c0_24] : memref<9x128x128xbf16, #tpu.memory_space<vmem>>, vector<1x128x128xbf16>
    %49 = vector.shape_cast %48 : vector<1x128x128xbf16> to vector<128x128xbf16>
    %cst_25 = arith.constant dense<0.000000e+00> : vector<128x128xf32>
    %50 = tpu.matmul %47, %49, %cst_25 {dimension_numbers = #tpu.dot_dimension_numbers<[1], [0], [0], [1], [0, 0, 1, 1], [], []>} : vector<128x128xbf16>, vector<128x128xbf16>, vector<128x128xf32> -> vector<128x128xf32>
    %51 = arith.addf %45, %50 : vector<128x128xf32>
    %52 = vector.extract_strided_slice %4 {offsets = [2, 2, 0], sizes = [8, 16, 128], strides = [1, 1, 1]} : vector<10x18x128xbf16> to vector<8x16x128xbf16>
    %53 = vector.shape_cast %52 : vector<8x16x128xbf16> to vector<128x128xbf16>
    %c8 = arith.constant 8 : index
    %c0_26 = arith.constant 0 : index
    %c0_27 = arith.constant 0 : index
    %54 = vector.load %arg3[%c8, %c0_26, %c0_27] : memref<9x128x128xbf16, #tpu.memory_space<vmem>>, vector<1x128x128xbf16>
    %55 = vector.shape_cast %54 : vector<1x128x128xbf16> to vector<128x128xbf16>
    %cst_28 = arith.constant dense<0.000000e+00> : vector<128x128xf32>
    %56 = tpu.matmul %53, %55, %cst_28 {dimension_numbers = #tpu.dot_dimension_numbers<[1], [0], [0], [1], [0, 0, 1, 1], [], []>} : vector<128x128xbf16>, vector<128x128xbf16>, vector<128x128xf32> -> vector<128x128xf32>
    %57 = arith.addf %51, %56 : vector<128x128xf32>
    %c0_29 = arith.constant 0 : index
    %c0_30 = arith.constant 0 : index
    %58 = vector.load %arg4[%c0_29, %c0_30] : memref<1x128xf32, #tpu.memory_space<vmem>>, vector<1x128xf32>
    %59 = vector.broadcast %58 : vector<1x128xf32> to vector<128x128xf32>
    %60 = arith.addf %57, %59 : vector<128x128xf32>
    %cst_31 = arith.constant 0.000000e+00 : f32
    %61 = vector.broadcast %cst_31 : f32 to vector<128x128xf32>
    %62 = arith.maximumf %60, %61 : vector<128x128xf32>
    %63 = vector.shape_cast %62 : vector<128x128xf32> to vector<8x16x128xf32>
    %c0_32 = arith.constant 0 : index
    %c0_33 = arith.constant 0 : index
    %c0_34 = arith.constant 0 : index
    %c0_35 = arith.constant 0 : index
    %64 = vector.load %arg5[%c0_32, %c0_33, %c0_34, %c0_35] : memref<1x8x16x128xf32, #tpu.memory_space<vmem>>, vector<1x8x16x128xf32>
    %65 = vector.shape_cast %64 : vector<1x8x16x128xf32> to vector<8x16x128xf32>
    %66 = vector.shape_cast %63 : vector<8x16x128xf32> to vector<1x8x16x128xf32>
    tpu.vector_store %arg5[%c0_32, %c0_33, %c0_34, %c0_35], %66 {strides = array<i32>} : memref<1x8x16x128xf32, #tpu.memory_space<vmem>>, vector<1x8x16x128xf32>,
    return
  }
  func.func @transform_0(%arg0: i32, %arg1: i32) -> (i32, i32, i32, i32) {
    %c0_i32 = arith.constant 0 : i32
    %c0_i32_0 = arith.constant 0 : i32
    %c0_i32_1 = arith.constant 0 : i32
    %c0_i32_2 = arith.constant 0 : i32
    return %arg0, %c0_i32, %c0_i32_0, %c0_i32_1 : i32, i32, i32, i32
  }
  func.func @transform_1(%arg0: i32, %arg1: i32) -> (i32, i32, i32) {
    %c0_i32 = arith.constant 0 : i32
    %c0_i32_0 = arith.constant 0 : i32
    %c0_i32_1 = arith.constant 0 : i32
    %c0_i32_2 = arith.constant 0 : i32
    return %c0_i32, %c0_i32_0, %c0_i32_1 : i32, i32, i32
  }
  func.func @transform_2(%arg0: i32, %arg1: i32) -> (i32, i32) {
    %c0_i32 = arith.constant 0 : i32
    %c0_i32_0 = arith.constant 0 : i32
    %c0_i32_1 = arith.constant 0 : i32
    return %c0_i32, %c0_i32_0 : i32, i32
  }
  func.func @transform_3(%arg0: i32, %arg1: i32) -> (i32, i32, i32, i32) {
    %c0_i32 = arith.constant 0 : i32
    %c0_i32_0 = arith.constant 0 : i32
    %c0_i32_1 = arith.constant 0 : i32
    return %arg0, %arg1, %c0_i32, %c0_i32_0 : i32, i32, i32, i32
  }
}

</mosaic_0001>

<llo_original>
// kernel: conv_bn_forward.1
$region0: #{conv_bn_forward.1}
  #allocation0 [shape = 'u32[]', space=smem, size = 0x4, offset = 0x4, fixed_abs, tag = 'smem constant byte address 0x4 - core index']
  #allocation1 [shape = 'u32[144,128]{1,0:T(1,128)}', space=vmem, size = 0x12000, scoped, tag = 'internal scratch']
  %s0 = inlined_call_operand.vmem [shape: bf16[2,18,18,128], index: 0, kind: input, shape index: {}]
  %s1 = inlined_call_operand.vmem [shape: bf16[9,128,128], index: 1, kind: input, shape index: {}]
  %s2 = inlined_call_operand.vmem [shape: f32[1,128], index: 2, kind: input, shape index: {}]
  %s3 = inlined_call_operand.vmem [shape: f32[2,16,16,128], index: 3, kind: output, shape index: {}]
  %s4 = sld [smem:[#allocation0]]
  $region45: #{conv_bn_forward.1} parent=0
    _
  %s6 = ssub.s32 1, %s4
  %s7 = scalar_select 0, %s6, %s4
  loop: start=0, step=1, limit=6
  $region2: #{conv_bn_forward.1} parent=0 // loop_pre_header
    _
  $region3: #{conv_bn_forward.1} parent=0 // loop_header
    %s9 = sphi 0, %s13
    %p10 = scmp.ge.s32.totalorder %s9, 6
    %s16 = sphi 0, %s28
    %s17 = sphi 0, %s24
    %s18 = sphi 0, %s16
    %s19 = sphi 0, %s17
    %s20 = sphi 0, %s18
    %s21 = sphi 0, %s19
    %s31 = sphi 0, %s33
    %s34 = sphi 0, %s31
    %s35 = sphi 0, %s34
    %s51 = sphi 0, %s35
    %s55 = sphi 0, %s55
    %s57 = sphi 0, %s55
    %s58 = sphi 0, %s57
    %s72 = sphi 0, %s58
    %s76 = sphi 0, %s76
    %s78 = sphi 0, %s76
    %s79 = sphi 0, %s78
    %s93 = sphi 0, %s79
    %s101 = sphi 0, %s103
    %s104 = sphi 0, %s101
    %s105 = sphi 0, %s104
    %s121 = sphi 0, %s105
  $region4: #{conv_bn_forward.1} parent=0 // loop_header_branch
    %12 = sbr.rel (%p10) target = $region8
  $region5: #{conv_bn_forward.1} parent=0 // loop_body
    %s14 = ssub.s32 %s9, 1
    %s15 = ssub.s32 %s9, 2
    %s22 = sadd.s32 1, %s17
    %p23 = scmp.ge.s32.totalorder %s22, 2
    %s24 = scalar_select %p23, 0, %s22
    %s25 = sadd.s32 1, %s16
    %s26 = scalar_select %p23, %s25, %s16
    %p27 = scmp.ge.s32.totalorder %s26, 2
    %s28 = scalar_select %p27, 0, %s26
    %s29 = ssub.s32 %s16, %s28
    %p30 = scmp.eq.s32.totalorder %s29, 0
    %s32 = sadd.s32 %s31, 1
    %s33 = scalar_select %p30, %s31, %s32
    %p36 = pneg %p30
    %p37 = scmp.eq.s32.totalorder %s9, 3
    %p38 = por %p36, %p37
    %p39 = scmp.ne.s32.totalorder %s31, %s34
    %p40 = scmp.eq.s32.totalorder %s9, 0
    %p41 = por %p39, %p40
    %p42 = scmp.ne.s32.totalorder %s31, %s34
    %p43 = scmp.eq.s32.totalorder %s14, 3
    %p44 = por %p42, %p43
    %p45 = scmp.ne.s32.totalorder %s34, %s35
    %p46 = scmp.eq.s32.totalorder %s14, 0
    %p47 = por %p45, %p46
    %p48 = scmp.ne.s32.totalorder %s34, %s35
    %p49 = scmp.eq.s32.totalorder %s15, 3
    %p50 = por %p48, %p49
    %p52 = scmp.ne.s32.totalorder %s35, %s51
    %p53 = scmp.eq.s32.totalorder %s15, 0
    %p54 = por %p52, %p53
    %s56 = sadd.s32 %s55, 1
    %p59 = scmp.eq.s32.totalorder %s9, 3
    %p60 = scmp.ne.s32.totalorder %s55, %s57
    %p61 = scmp.eq.s32.totalorder %s9, 0
    %p62 = por %p60, %p61
    %p63 = scmp.ne.s32.totalorder %s55, %s57
    %p64 = scmp.eq.s32.totalorder %s14, 3
    %p65 = por %p63, %p64
    %p66 = scmp.ne.s32.totalorder %s57, %s58
    %p67 = scmp.eq.s32.totalorder %s14, 0
    %p68 = por %p66, %p67
    %p69 = scmp.ne.s32.totalorder %s57, %s58
    %p70 = scmp.eq.s32.totalorder %s15, 3
    %p71 = por %p69, %p70
    %p73 = scmp.ne.s32.totalorder %s58, %s72
    %p74 = scmp.eq.s32.totalorder %s15, 0
    %p75 = por %p73, %p74
    %s77 = sadd.s32 %s76, 1
    %p80 = scmp.eq.s32.totalorder %s9, 3
    %p81 = scmp.ne.s32.totalorder %s76, %s78
    %p82 = scmp.eq.s32.totalorder %s9, 0
    %p83 = por %p81, %p82
    %p84 = scmp.ne.s32.totalorder %s76, %s78
    %p85 = scmp.eq.s32.totalorder %s14, 3
    %p86 = por %p84, %p85
    %p87 = scmp.ne.s32.totalorder %s78, %s79
    %p88 = scmp.eq.s32.totalorder %s14, 0
    %p89 = por %p87, %p88
    %p90 = scmp.ne.s32.totalorder %s78, %s79
    %p91 = scmp.eq.s32.totalorder %s15, 3
    %p92 = por %p90, %p91
    %p94 = scmp.ne.s32.totalorder %s79, %s93
    %p95 = scmp.eq.s32.totalorder %s15, 0
    %p96 = por %p94, %p95
    %s97 = ssub.s32 %s16, %s28
    %s98 = ssub.s32 %s17, %s24
    %s99 = sor.u32 %s97, %s98
    %p100 = scmp.eq.s32.totalorder %s99, 0
    %s102 = sadd.s32 %s101, 1
    %s103 = scalar_select %p100, %s101, %s102
    %p106 = pneg %p100
    %p107 = scmp.eq.s32.totalorder %s9, 3
    %p108 = por %p106, %p107
    %p109 = scmp.ne.s32.totalorder %s101, %s104
    %p110 = scmp.eq.s32.totalorder %s9, 0
    %p111 = por %p109, %p110
    %p112 = scmp.ne.s32.totalorder %s101, %s104
    %p113 = scmp.eq.s32.totalorder %s14, 3
    %p114 = por %p112, %p113
    %p115 = scmp.ne.s32.totalorder %s104, %s105
    %p116 = scmp.eq.s32.totalorder %s14, 0
    %p117 = por %p115, %p116
    %p118 = scmp.ne.s32.totalorder %s104, %s105
    %p119 = scmp.eq.s32.totalorder %s15, 3
    %p120 = por %p118, %p119
    %p122 = scmp.ne.s32.totalorder %s105, %s121
    %p123 = scmp.eq.s32.totalorder %s15, 0
    %p124 = por %p122, %p123
    %p125 = scmp.le.s32.totalorder 1, %s9
    %p126 = scmp.lt.s32.totalorder %s9, 5
    %p127 = pnand %p125, %p126
    %p128 = pneg %p127
    // Predicated region
    $region9: #{conv_bn_forward.1} parent=5 // pred_check
      _
    $region10: #{conv_bn_forward.1} parent=5 // pred_check_branch
      %130 = sbr.rel (%p127) target = $region12
    $region11: #{conv_bn_forward.1} parent=5 // pred_region
      %s131 = ssub.s32 %s9, 1
      // Predicated region
      $region13: #{conv_bn_forward.1} parent=11 // pred_check
        %p132 = pneg %p68
      $region14: #{conv_bn_forward.1} parent=11 // pred_check_branch
        %134 = sbr.rel (%p132) target = $region16
      $region15: #{conv_bn_forward.1} parent=11 // pred_region
        _
      $region16: #{conv_bn_forward.1} parent=11 // pred_fallthru
        _
      // Predicated region
      $region17: #{conv_bn_forward.1} parent=11 // pred_check
        %p135 = pneg %p89
      $region18: #{conv_bn_forward.1} parent=11 // pred_check_branch
        %137 = sbr.rel (%p135) target = $region20
      $region19: #{conv_bn_forward.1} parent=11 // pred_region
        _
      $region20: #{conv_bn_forward.1} parent=11 // pred_fallthru
        _
    $region12: #{conv_bn_forward.1} parent=5 // pred_fallthru
      _
    %p138 = scmp.lt.s32.totalorder %s9, 4
    // Predicated region
    $region21: #{conv_bn_forward.1} parent=5 // pred_check
      %p139 = pneg %p138
    $region22: #{conv_bn_forward.1} parent=5 // pred_check_branch
      %141 = sbr.rel (%p139) target = $region24
    $region23: #{conv_bn_forward.1} parent=5 // pred_region
      // Predicated region
      $region25: #{conv_bn_forward.1} parent=23 // pred_check
        %p142 = pneg %p41
      $region26: #{conv_bn_forward.1} parent=23 // pred_check_branch
        %144 = sbr.rel (%p142) target = $region28
      $region27: #{conv_bn_forward.1} parent=23 // pred_region
        %p145 = scmp.lt.s32.totalorder %s16, 1
        %s146 = scalar_select %p145, %s16, 1
        %s147 = smul.addr %s146, 54
        %s148 = smul.addr %s147, 4
        %s149 = scalar_lea.vmem %s0, %s148
      $region28: #{conv_bn_forward.1} parent=23 // pred_fallthru
        _
    $region24: #{conv_bn_forward.1} parent=5 // pred_fallthru
      _
    %p150 = scmp.le.s32.totalorder 1, %s9
    %p151 = scmp.lt.s32.totalorder %s9, 5
    %p152 = pnand %p150, %p151
    %p153 = pneg %p152
    // Predicated region
    $region29: #{conv_bn_forward.1} parent=5 // pred_check
      _
    $region30: #{conv_bn_forward.1} parent=5 // pred_check_branch
      %155 = sbr.rel (%p152) target = $region32
    $region31: #{conv_bn_forward.1} parent=5 // pred_region
      %s156 = ssub.s32 %s9, 1
      %p157 = scmp.lt.s32.totalorder %s18, 1
      %s158 = scalar_select %p157, %s18, 1
      %s159 = smul.addr %s158, 54
      %s160 = smul.addr %s159, 4
      %s161 = scalar_lea.vmem %s0, %s160
      %p162 = pneg %p47
      %p163 = pneg %p44
      %p164 = pneg %p68
      %p165 = pneg %p65
      %p166 = pneg %p89
      %p167 = pneg %p86
      %p168 = pneg %p117
      %p169 = pneg %p114
      %s170 = smul.u32 8, %s19
      %p171 = scmp.lt.s32.totalorder %s18, 1
      %s172 = scalar_select %p171, %s18, 1
      %p173 = scmp.lt.s32.totalorder %s170, 15
      %s174 = scalar_select %p173, %s170, 15
      %s175 = smul.addr %s174, 2
      %s176 = smul.addr %s172, 32
      %s177 = sadd.s32 %s175, %s176
      %s178 = smul.addr %s177, 8
      %s179 = scalar_lea.vmem %s3, %s178
      %p180 = scmp.lt.s32.totalorder %s18, 1
      %s181 = scalar_select %p180, %s18, 1
      %s182 = smul.addr %s181, 54
      %s183 = smul.addr %s182, 4
      %s184 = scalar_lea.vmem %s0, %s183
      %s185 = smul.u32 8, %s19
      %p186 = scmp.lt.s32.totalorder %s18, 1
      %s187 = scalar_select %p186, %s18, 1
      %p188 = scmp.lt.s32.totalorder %s185, 15
      %s189 = scalar_select %p188, %s185, 15
      %s190 = smul.addr %s189, 2
      %s191 = smul.addr %s187, 32
      %s192 = sadd.s32 %s190, %s191
      %s193 = smul.addr %s192, 8
      %s194 = scalar_lea.vmem %s3, %s193
      %s195 = smul.u32 8, %s19
      %s197 = smul.u32 %s19, 8
      %s198 = smul.u32 %s197, 3
      %s199 = smul.addr %s198, 4
      %s200 = scalar_lea.vmem %s184, %s199
      %v201 = vld [vmem:[%s200] sm:$0xf]
      %v202 = vld [vmem:[%s200 + $0x4] sm:$0xf]
      %v203 = vld [vmem:[%s200 + $0x8] sm:$0x1]
      %v204 = vld [vmem:[%s200 + $0xc] sm:$0xf]
      %v205 = vld [vmem:[%s200 + $0x10] sm:$0xf]
      %v206 = vld [vmem:[%s200 + $0x14] sm:$0x1]
      %v207 = vld [vmem:[%s200 + $0x18] sm:$0xf]
      %v208 = vld [vmem:[%s200 + $0x1c] sm:$0xf]
      %v209 = vld [vmem:[%s200 + $0x20] sm:$0x1]
      %v210 = vld [vmem:[%s200 + $0x24] sm:$0xf]
      %v211 = vld [vmem:[%s200 + $0x28] sm:$0xf]
      %v212 = vld [vmem:[%s200 + $0x2c] sm:$0x1]
      %v213 = vld [vmem:[%s200 + $0x30] sm:$0xf]
      %v214 = vld [vmem:[%s200 + $0x34] sm:$0xf]
      %v215 = vld [vmem:[%s200 + $0x38] sm:$0x1]
      %v216 = vld [vmem:[%s200 + $0x3c] sm:$0xf]
      %v217 = vld [vmem:[%s200 + $0x40] sm:$0xf]
      %v218 = vld [vmem:[%s200 + $0x44] sm:$0x1]
      %v219 = vld [vmem:[%s200 + $0x48] sm:$0xf]
      %v220 = vld [vmem:[%s200 + $0x4c] sm:$0xf]
      %v221 = vld [vmem:[%s200 + $0x50] sm:$0x1]
      %v222 = vld [vmem:[%s200 + $0x54] sm:$0xf]
      %v223 = vld [vmem:[%s200 + $0x58] sm:$0xf]
      %v224 = vld [vmem:[%s200 + $0x5c] sm:$0x1]
      %v225 = vld [vmem:[%s200 + $0x60] sm:$0xf]
      %v226 = vld [vmem:[%s200 + $0x64] sm:$0xf]
      %v227 = vld [vmem:[%s200 + $0x68] sm:$0x1]
      %v228 = vld [vmem:[%s200 + $0x6c] sm:$0xf]
      %v229 = vld [vmem:[%s200 + $0x70] sm:$0xf]
      %v230 = vld [vmem:[%s200 + $0x74] sm:$0x1]
      %v231 = vld [vmem:[%s1] sm:$0xf]
      %v232 = vld [vmem:[%s1 + $0x4] sm:$0xf]
      %v233 = vld [vmem:[%s1 + $0x8] sm:$0xf]
      %v234 = vld [vmem:[%s1 + $0xc] sm:$0xf]
      %v235 = vld [vmem:[%s1 + $0x10] sm:$0xf]
      %v236 = vld [vmem:[%s1 + $0x14] sm:$0xf]
      %v237 = vld [vmem:[%s1 + $0x18] sm:$0xf]
      %v238 = vld [vmem:[%s1 + $0x1c] sm:$0xf]
      %v239 = vld [vmem:[%s1 + $0x20] sm:$0xf]
      %v240 = vld [vmem:[%s1 + $0x24] sm:$0xf]
      %v241 = vld [vmem:[%s1 + $0x28] sm:$0xf]
      %v242 = vld [vmem:[%s1 + $0x2c] sm:$0xf]
      %v243 = vld [vmem:[%s1 + $0x30] sm:$0xf]
      %v244 = vld [vmem:[%s1 + $0x34] sm:$0xf]
      %v245 = vld [vmem:[%s1 + $0x38] sm:$0xf]
      %v246 = vld [vmem:[%s1 + $0x3c] sm:$0xf]
      %vm247 = vsmask.f32 3328
      %vm248 = vsmask.f32 7440
      %vm249 = vmor %vm247, %vm248
      %v251 = vshrl.u32 %v201, 16
      %v253 = vrot.slane %v251, 4
      %v254 = vshll.u32 %v201, 16
      %v256 = vrot.slane %v254, 5
      %v257 = vor.u32 %v253, %v256
      %v258 = vrot.slane %v257, 4
      %v260 = vshll.u32 %v202, 16
      %v262 = vrot.slane %v260, 5
      %v263 = vsel %vm249, %v258, %v262
      %v264 = vshrl.u32 %v202, 16
      %v266 = vrot.slane %v264, 4
      %v267 = vor.u32 %v266, %v262
      %v268 = vrot.slane %v267, 4
      %v270 = vshll.u32 %v203, 16
      %v272 = vrot.slane %v270, 5
      %v273 = vsel %vm249, %v268, %v272
      %v275 = vshrl.u32 %v204, 16
      %v277 = vrot.slane %v275, 4
      %v278 = vshll.u32 %v204, 16
      %v280 = vrot.slane %v278, 5
      %v281 = vor.u32 %v277, %v280
      %v282 = vrot.slane %v281, 4
      %v284 = vshll.u32 %v205, 16
      %v286 = vrot.slane %v284, 5
      %v287 = vsel %vm249, %v282, %v286
      %v288 = vshrl.u32 %v205, 16
      %v290 = vrot.slane %v288, 4
      %v291 = vor.u32 %v290, %v286
      %v292 = vrot.slane %v291, 4
      %v294 = vshll.u32 %v206, 16
      %v296 = vrot.slane %v294, 5
      %v297 = vsel %vm249, %v292, %v296
      %v299 = vshrl.u32 %v207, 16
      %v301 = vrot.slane %v299, 4
      %v302 = vshll.u32 %v207, 16
      %v304 = vrot.slane %v302, 5
      %v305 = vor.u32 %v301, %v304
      %v306 = vrot.slane %v305, 4
      %v308 = vshll.u32 %v208, 16
      %v310 = vrot.slane %v308, 5
      %v311 = vsel %vm249, %v306, %v310
      %v312 = vshrl.u32 %v208, 16
      %v314 = vrot.slane %v312, 4
      %v315 = vor.u32 %v314, %v310
      %v316 = vrot.slane %v315, 4
      %v318 = vshll.u32 %v209, 16
      %v320 = vrot.slane %v318, 5
      %v321 = vsel %vm249, %v316, %v320
      %v323 = vshrl.u32 %v210, 16
      %v325 = vrot.slane %v323, 4
      %v326 = vshll.u32 %v210, 16
      %v328 = vrot.slane %v326, 5
      %v329 = vor.u32 %v325, %v328
      %v330 = vrot.slane %v329, 4
      %v332 = vshll.u32 %v211, 16
      %v334 = vrot.slane %v332, 5
      %v335 = vsel %vm249, %v330, %v334
      %v336 = vshrl.u32 %v211, 16
      %v338 = vrot.slane %v336, 4
      %v339 = vor.u32 %v338, %v334
      %v340 = vrot.slane %v339, 4
      %v342 = vshll.u32 %v212, 16
      %v344 = vrot.slane %v342, 5
      %v345 = vsel %vm249, %v340, %v344
      %v347 = vshrl.u32 %v213, 16
      %v349 = vrot.slane %v347, 4
      %v350 = vshll.u32 %v213, 16
      %v352 = vrot.slane %v350, 5
      %v353 = vor.u32 %v349, %v352
      %v354 = vrot.slane %v353, 4
      %v356 = vshll.u32 %v214, 16
      %v358 = vrot.slane %v356, 5
      %v359 = vsel %vm249, %v354, %v358
      %v360 = vshrl.u32 %v214, 16
      %v362 = vrot.slane %v360, 4
      %v363 = vor.u32 %v362, %v358
      %v364 = vrot.slane %v363, 4
      %v366 = vshll.u32 %v215, 16
      %v368 = vrot.slane %v366, 5
      %v369 = vsel %vm249, %v364, %v368
      %v371 = vshrl.u32 %v216, 16
      %v373 = vrot.slane %v371, 4
      %v374 = vshll.u32 %v216, 16
      %v376 = vrot.slane %v374, 5
      %v377 = vor.u32 %v373, %v376
      %v378 = vrot.slane %v377, 4
      %v380 = vshll.u32 %v217, 16
      %v382 = vrot.slane %v380, 5
      %v383 = vsel %vm249, %v378, %v382
      %v384 = vshrl.u32 %v217, 16
      %v386 = vrot.slane %v384, 4
      %v387 = vor.u32 %v386, %v382
      %v388 = vrot.slane %v387, 4
      %v390 = vshll.u32 %v218, 16
      %v392 = vrot.slane %v390, 5
      %v393 = vsel %vm249, %v388, %v392
      %v395 = vshrl.u32 %v219, 16
      %v397 = vrot.slane %v395, 4
      %v398 = vshll.u32 %v219, 16
      %v400 = vrot.slane %v398, 5
      %v401 = vor.u32 %v397, %v400
      %v402 = vrot.slane %v401, 4
      %v404 = vshll.u32 %v220, 16
      %v406 = vrot.slane %v404, 5
      %v407 = vsel %vm249, %v402, %v406
      %v408 = vshrl.u32 %v220, 16
      %v410 = vrot.slane %v408, 4
      %v411 = vor.u32 %v410, %v406
      %v412 = vrot.slane %v411, 4
      %v414 = vshll.u32 %v221, 16
      %v416 = vrot.slane %v414, 5
      %v417 = vsel %vm249, %v412, %v416
      %v419 = vshrl.u32 %v222, 16
      %v421 = vrot.slane %v419, 4
      %v422 = vshll.u32 %v222, 16
      %v424 = vrot.slane %v422, 5
      %v425 = vor.u32 %v421, %v424
      %v426 = vrot.slane %v425, 4
      %v428 = vshll.u32 %v223, 16
      %v430 = vrot.slane %v428, 5
      %v431 = vsel %vm249, %v426, %v430
      %v432 = vshrl.u32 %v223, 16
      %v434 = vrot.slane %v432, 4
      %v435 = vor.u32 %v434, %v430
      %v436 = vrot.slane %v435, 4
      %v438 = vshll.u32 %v224, 16
      %v440 = vrot.slane %v438, 5
      %v441 = vsel %vm249, %v436, %v440
      %s442 = scalar_lea.vmem %s1, 64
      %v443 = vld [vmem:[%s442] sm:$0xf]
      %v444 = vld [vmem:[%s442 + $0x4] sm:$0xf]
      %v445 = vld [vmem:[%s442 + $0x8] sm:$0xf]
      %v446 = vld [vmem:[%s442 + $0xc] sm:$0xf]
      %v447 = vld [vmem:[%s442 + $0x10] sm:$0xf]
      %v448 = vld [vmem:[%s442 + $0x14] sm:$0xf]
      %v449 = vld [vmem:[%s442 + $0x18] sm:$0xf]
      %v450 = vld [vmem:[%s442 + $0x1c] sm:$0xf]
      %v451 = vld [vmem:[%s442 + $0x20] sm:$0xf]
      %v452 = vld [vmem:[%s442 + $0x24] sm:$0xf]
      %v453 = vld [vmem:[%s442 + $0x28] sm:$0xf]
      %v454 = vld [vmem:[%s442 + $0x2c] sm:$0xf]
      %v455 = vld [vmem:[%s442 + $0x30] sm:$0xf]
      %v456 = vld [vmem:[%s442 + $0x34] sm:$0xf]
      %v457 = vld [vmem:[%s442 + $0x38] sm:$0xf]
      %v458 = vld [vmem:[%s442 + $0x3c] sm:$0xf]
      %v459 = vunpack.c.l.b16 %v263
      %v460 = vunpack.c.l.b16 %v273
      %v461 = vunpack.c.l.b16 %v287
      %v462 = vunpack.c.l.b16 %v297
      %v463 = vunpack.c.l.b16 %v311
      %v464 = vunpack.c.l.b16 %v321
      %v465 = vunpack.c.l.b16 %v335
      %v466 = vunpack.c.l.b16 %v345
      %v467 = vunpack.c.l.b16 %v359
      %v468 = vunpack.c.l.b16 %v369
      %v469 = vunpack.c.l.b16 %v383
      %v470 = vunpack.c.l.b16 %v393
      %v471 = vunpack.c.l.b16 %v407
      %v472 = vunpack.c.l.b16 %v417
      %v473 = vunpack.c.l.b16 %v431
      %v474 = vunpack.c.l.b16 %v441
      %v475 = vpack.c.b16 %v460, %v459
      %v476 = vpack.c.b16 %v462, %v461
      %v477 = vpack.c.b16 %v464, %v463
      %v478 = vpack.c.b16 %v466, %v465
      %v479 = vpack.c.b16 %v468, %v467
      %v480 = vpack.c.b16 %v470, %v469
      %v481 = vpack.c.b16 %v472, %v471
      %v482 = vpack.c.b16 %v474, %v473
      %v507 = vunpack.c.l.b16 %v443
      %v508 = vunpack.c.l.b16 %v444
      %v509 = vunpack.c.l.b16 %v445
      %v510 = vunpack.c.l.b16 %v446
      %v511 = vunpack.c.l.b16 %v447
      %v512 = vunpack.c.l.b16 %v448
      %v513 = vunpack.c.l.b16 %v449
      %v514 = vunpack.c.l.b16 %v450
      %v515 = vunpack.c.l.b16 %v451
      %v516 = vunpack.c.l.b16 %v452
      %v517 = vunpack.c.l.b16 %v453
      %v518 = vunpack.c.l.b16 %v454
      %v519 = vunpack.c.l.b16 %v455
      %v520 = vunpack.c.l.b16 %v456
      %v521 = vunpack.c.l.b16 %v457
      %v522 = vunpack.c.l.b16 %v458
      %v523 = vpack.c.b16 %v508, %v507
      %v524 = vpack.c.b16 %v510, %v509
      %v525 = vpack.c.b16 %v512, %v511
      %v526 = vpack.c.b16 %v514, %v513
      %v527 = vpack.c.b16 %v516, %v515
      %v528 = vpack.c.b16 %v518, %v517
      %v529 = vpack.c.b16 %v520, %v519
      %v530 = vpack.c.b16 %v522, %v521
      %539 = vmatprep.subr.bf16.mxu0 0
      %540 = vmatpush1.bf16.msra.mxu0 %v523
      %541 = vmatprep.subr.bf16.mxu0 0
      %542 = vmatpush1.bf16.msra.mxu0 %v524
      %543 = vmatprep.subr.bf16.mxu0 0
      %544 = vmatpush1.bf16.msra.mxu0 %v525
      %545 = vmatprep.subr.bf16.mxu0 0
      %546 = vmatpush1.bf16.msra.mxu0 %v526
      %547 = vmatprep.subr.bf16.mxu0 0
      %548 = vmatpush1.bf16.msra.mxu0 %v527
      %549 = vmatprep.subr.bf16.mxu0 0
      %550 = vmatpush1.bf16.msra.mxu0 %v528
      %551 = vmatprep.subr.bf16.mxu0 0
      %552 = vmatpush1.bf16.msra.mxu0 %v529
      %553 = vmatprep.subr.bf16.mxu0 0
      %554 = vmatpush1.bf16.msra.mxu0 %v530
      %555 = vmatprep.subr.bf16.mxu0 0
      %556 = vmatpush1.bf16.msra.mxu0 0
      %557 = vmatprep.subr.bf16.mxu0 0
      %558 = vmatpush1.bf16.msra.mxu0 0
      %559 = vmatprep.subr.bf16.mxu0 0
      %560 = vmatpush1.bf16.msra.mxu0 0
      %561 = vmatprep.subr.bf16.mxu0 0
      %562 = vmatpush1.bf16.msra.mxu0 0
      %563 = vmatprep.subr.bf16.mxu0 0
      %564 = vmatpush1.bf16.msra.mxu0 0
      %565 = vmatprep.subr.bf16.mxu0 0
      %566 = vmatpush1.bf16.msra.mxu0 0
      %567 = vmatprep.subr.bf16.mxu0 0
      %568 = vmatpush1.bf16.msra.mxu0 0
      %569 = vmatprep.subr.bf16.mxu0 0
      %570 = vmatpush1.bf16.msra.mxu0 0
      %571 = vmatprep.mubr.bf16.mxu0 0
      %572 = vmatmul.mubr.bf16.gmra.mrb[0].mxu0 %v475
      %v573 = vpop.f32.mrb[0].mxu0
      %v574 = vadd.f32 0.0, %v573
      %v575 = vpop.f32.mrb[0].mxu0
      %v576 = vpop.f32.mrb[0].mxu0
      %v577 = vadd.f32 0.0, %v576
      %v578 = vpop.f32.mrb[0].mxu0
      %579 = vmatprep.mubr.bf16.mxu0 0
      %580 = vmatmul.mubr.bf16.gmra.mrb[0].mxu0 %v476
      %v581 = vpop.f32.mrb[0].mxu0
      %v582 = vadd.f32 0.0, %v581
      %v583 = vpop.f32.mrb[0].mxu0
      %v584 = vpop.f32.mrb[0].mxu0
      %v585 = vadd.f32 0.0, %v584
      %v586 = vpop.f32.mrb[0].mxu0
      %587 = vmatprep.mubr.bf16.mxu0 0
      %588 = vmatmul.mubr.bf16.gmra.mrb[0].mxu0 %v477
      %v589 = vpop.f32.mrb[0].mxu0
      %v590 = vadd.f32 0.0, %v589
      %v591 = vpop.f32.mrb[0].mxu0
      %v592 = vpop.f32.mrb[0].mxu0
      %v593 = vadd.f32 0.0, %v592
      %v594 = vpop.f32.mrb[0].mxu0
      %595 = vmatprep.mubr.bf16.mxu0 0
      %596 = vmatmul.mubr.bf16.gmra.mrb[0].mxu0 %v478
      %v597 = vpop.f32.mrb[0].mxu0
      %v598 = vadd.f32 0.0, %v597
      %v599 = vpop.f32.mrb[0].mxu0
      %v600 = vpop.f32.mrb[0].mxu0
      %v601 = vadd.f32 0.0, %v600
      %v602 = vpop.f32.mrb[0].mxu0
      %603 = vmatprep.mubr.bf16.mxu0 0
      %604 = vmatmul.mubr.bf16.gmra.mrb[0].mxu0 %v479
      %v605 = vpop.f32.mrb[0].mxu0
      %v606 = vadd.f32 0.0, %v605
      %v607 = vpop.f32.mrb[0].mxu0
      %v608 = vpop.f32.mrb[0].mxu0
      %v609 = vadd.f32 0.0, %v608
      %v610 = vpop.f32.mrb[0].mxu0
      %611 = vmatprep.mubr.bf16.mxu0 0
      %612 = vmatmul.mubr.bf16.gmra.mrb[0].mxu0 %v480
      %v613 = vpop.f32.mrb[0].mxu0
      %v614 = vadd.f32 0.0, %v613
      %v615 = vpop.f32.mrb[0].mxu0
      %v616 = vpop.f32.mrb[0].mxu0
      %v617 = vadd.f32 0.0, %v616
      %v618 = vpop.f32.mrb[0].mxu0
      %619 = vmatprep.mubr.bf16.mxu0 0
      %620 = vmatmul.mubr.bf16.gmra.mrb[0].mxu0 %v481
      %v621 = vpop.f32.mrb[0].mxu0
      %v622 = vadd.f32 0.0, %v621
      %v623 = vpop.f32.mrb[0].mxu0
      %v624 = vpop.f32.mrb[0].mxu0
      %v625 = vadd.f32 0.0, %v624
      %v626 = vpop.f32.mrb[0].mxu0
      %627 = vmatprep.mubr.bf16.mxu0 0
      %628 = vmatmul.mubr.bf16.gmra.mrb[0].mxu0 %v482
      %v629 = vpop.f32.mrb[0].mxu0
      %v630 = vadd.f32 0.0, %v629
      %v631 = vpop.f32.mrb[0].mxu0
      %v632 = vpop.f32.mrb[0].mxu0
      %v633 = vadd.f32 0.0, %v632
      %v634 = vpop.f32.mrb[0].mxu0
      %635 = vdwg.mxu0
      %v652 = vunpack.c.l.b16 %v201
      %v653 = vunpack.c.l.b16 %v202
      %v654 = vunpack.c.l.b16 %v204
      %v655 = vunpack.c.l.b16 %v205
      %v656 = vunpack.c.l.b16 %v207
      %v657 = vunpack.c.l.b16 %v208
      %v658 = vunpack.c.l.b16 %v210
      %v659 = vunpack.c.l.b16 %v211
      %v660 = vunpack.c.l.b16 %v213
      %v661 = vunpack.c.l.b16 %v214
      %v662 = vunpack.c.l.b16 %v216
      %v663 = vunpack.c.l.b16 %v217
      %v664 = vunpack.c.l.b16 %v219
      %v665 = vunpack.c.l.b16 %v220
      %v666 = vunpack.c.l.b16 %v222
      %v667 = vunpack.c.l.b16 %v223
      %v668 = vpack.c.b16 %v653, %v652
      %v669 = vpack.c.b16 %v655, %v654
      %v670 = vpack.c.b16 %v657, %v656
      %v671 = vpack.c.b16 %v659, %v658
      %v672 = vpack.c.b16 %v661, %v660
      %v673 = vpack.c.b16 %v663, %v662
      %v674 = vpack.c.b16 %v665, %v664
      %v675 = vpack.c.b16 %v667, %v666
      %v700 = vunpack.c.l.b16 %v231
      %v701 = vunpack.c.l.b16 %v232
      %v702 = vunpack.c.l.b16 %v233
      %v703 = vunpack.c.l.b16 %v234
      %v704 = vunpack.c.l.b16 %v235
      %v705 = vunpack.c.l.b16 %v236
      %v706 = vunpack.c.l.b16 %v237
      %v707 = vunpack.c.l.b16 %v238
      %v708 = vunpack.c.l.b16 %v239
      %v709 = vunpack.c.l.b16 %v240
      %v710 = vunpack.c.l.b16 %v241
      %v711 = vunpack.c.l.b16 %v242
      %v712 = vunpack.c.l.b16 %v243
      %v713 = vunpack.c.l.b16 %v244
      %v714 = vunpack.c.l.b16 %v245
      %v715 = vunpack.c.l.b16 %v246
      %v716 = vpack.c.b16 %v701, %v700
      %v717 = vpack.c.b16 %v703, %v702
      %v718 = vpack.c.b16 %v705, %v704
      %v719 = vpack.c.b16 %v707, %v706
      %v720 = vpack.c.b16 %v709, %v708
      %v721 = vpack.c.b16 %v711, %v710
      %v722 = vpack.c.b16 %v713, %v712
      %v723 = vpack.c.b16 %v715, %v714
      %732 = vmatprep.subr.bf16.mxu0 0
      %733 = vmatpush1.bf16.msra.mxu0 %v716
      %734 = vmatprep.subr.bf16.mxu0 0
      %735 = vmatpush1.bf16.msra.mxu0 %v717
      %736 = vmatprep.subr.bf16.mxu0 0
      %737 = vmatpush1.bf16.msra.mxu0 %v718
      %738 = vmatprep.subr.bf16.mxu0 0
      %739 = vmatpush1.bf16.msra.mxu0 %v719
      %740 = vmatprep.subr.bf16.mxu0 0
      %741 = vmatpush1.bf16.msra.mxu0 %v720
      %742 = vmatprep.subr.bf16.mxu0 0
      %743 = vmatpush1.bf16.msra.mxu0 %v721
      %744 = vmatprep.subr.bf16.mxu0 0
      %745 = vmatpush1.bf16.msra.mxu0 %v722
      %746 = vmatprep.subr.bf16.mxu0 0
      %747 = vmatpush1.bf16.msra.mxu0 %v723
      %748 = vmatprep.subr.bf16.mxu0 0
      %749 = vmatpush1.bf16.msra.mxu0 0
      %750 = vmatprep.subr.bf16.mxu0 0
      %751 = vmatpush1.bf16.msra.mxu0 0
      %752 = vmatprep.subr.bf16.mxu0 0
      %753 = vmatpush1.bf16.msra.mxu0 0
      %754 = vmatprep.subr.bf16.mxu0 0
      %755 = vmatpush1.bf16.msra.mxu0 0
      %756 = vmatprep.subr.bf16.mxu0 0
      %757 = vmatpush1.bf16.msra.mxu0 0
      %758 = vmatprep.subr.bf16.mxu0 0
      %759 = vmatpush1.bf16.msra.mxu0 0
      %760 = vmatprep.subr.bf16.mxu0 0
      %761 = vmatpush1.bf16.msra.mxu0 0
      %762 = vmatprep.subr.bf16.mxu0 0
      %763 = vmatpush1.bf16.msra.mxu0 0
      %764 = vmatprep.mubr.bf16.mxu0 0
      %765 = vmatmul.mubr.bf16.gmra.mrb[0].mxu0 %v668
      %v766 = vpop.f32.mrb[0].mxu0
      %v767 = vadd.f32 %v574, %v766
      %v768 = vpop.f32.mrb[0].mxu0
      %v769 = vpop.f32.mrb[0].mxu0
      %v770 = vadd.f32 %v577, %v769
      %v771 = vpop.f32.mrb[0].mxu0
      %772 = vmatprep.mubr.bf16.mxu0 0
      %773 = vmatmul.mubr.bf16.gmra.mrb[0].mxu0 %v669
      %v774 = vpop.f32.mrb[0].mxu0
      %v775 = vadd.f32 %v582, %v774
      %v776 = vpop.f32.mrb[0].mxu0
      %v777 = vpop.f32.mrb[0].mxu0
      %v778 = vadd.f32 %v585, %v777
      %v779 = vpop.f32.mrb[0].mxu0
      %780 = vmatprep.mubr.bf16.mxu0 0
      %781 = vmatmul.mubr.bf16.gmra.mrb[0].mxu0 %v670
      %v782 = vpop.f32.mrb[0].mxu0
      %v783 = vadd.f32 %v590, %v782
      %v784 = vpop.f32.mrb[0].mxu0
      %v785 = vpop.f32.mrb[0].mxu0
      %v786 = vadd.f32 %v593, %v785
      %v787 = vpop.f32.mrb[0].mxu0
      %788 = vmatprep.mubr.bf16.mxu0 0
      %789 = vmatmul.mubr.bf16.gmra.mrb[0].mxu0 %v671
      %v790 = vpop.f32.mrb[0].mxu0
      %v791 = vadd.f32 %v598, %v790
      %v792 = vpop.f32.mrb[0].mxu0
      %v793 = vpop.f32.mrb[0].mxu0
      %v794 = vadd.f32 %v601, %v793
      %v795 = vpop.f32.mrb[0].mxu0
      %796 = vmatprep.mubr.bf16.mxu0 0
      %797 = vmatmul.mubr.bf16.gmra.mrb[0].mxu0 %v672
      %v798 = vpop.f32.mrb[0].mxu0
      %v799 = vadd.f32 %v606, %v798
      %v800 = vpop.f32.mrb[0].mxu0
      %v801 = vpop.f32.mrb[0].mxu0
      %v802 = vadd.f32 %v609, %v801
      %v803 = vpop.f32.mrb[0].mxu0
      %804 = vmatprep.mubr.bf16.mxu0 0
      %805 = vmatmul.mubr.bf16.gmra.mrb[0].mxu0 %v673
      %v806 = vpop.f32.mrb[0].mxu0
      %v807 = vadd.f32 %v614, %v806
      %v808 = vpop.f32.mrb[0].mxu0
      %v809 = vpop.f32.mrb[0].mxu0
      %v810 = vadd.f32 %v617, %v809
      %v811 = vpop.f32.mrb[0].mxu0
      %812 = vmatprep.mubr.bf16.mxu0 0
      %813 = vmatmul.mubr.bf16.gmra.mrb[0].mxu0 %v674
      %v814 = vpop.f32.mrb[0].mxu0
      %v815 = vadd.f32 %v622, %v814
      %v816 = vpop.f32.mrb[0].mxu0
      %v817 = vpop.f32.mrb[0].mxu0
      %v818 = vadd.f32 %v625, %v817
      %v819 = vpop.f32.mrb[0].mxu0
      %820 = vmatprep.mubr.bf16.mxu0 0
      %821 = vmatmul.mubr.bf16.gmra.mrb[0].mxu0 %v675
      %v822 = vpop.f32.mrb[0].mxu0
      %v823 = vadd.f32 %v630, %v822
      %v824 = vpop.f32.mrb[0].mxu0
      %v825 = vpop.f32.mrb[0].mxu0
      %v826 = vadd.f32 %v633, %v825
      %v827 = vpop.f32.mrb[0].mxu0
      %828 = vdwg.mxu0
      %vm837 = vcmask 1042432
      %vm838 = vcmask 1046532
      %vm839 = vmor %vm837, %vm838
      %v840 = vrot.slane %v201, 5
      %v841 = vrot.slane %v840, 4
      %v842 = vrot.slane %v202, 5
      %v843 = vsel %vm839, %v841, %v842
      %v844 = vrot.slane %v842, 4
      %v845 = vrot.slane %v203, 5
      %v846 = vsel %vm839, %v844, %v845
      %v847 = vrot.slane %v204, 5
      %v848 = vrot.slane %v847, 4
      %v849 = vrot.slane %v205, 5
      %v850 = vsel %vm839, %v848, %v849
      %v851 = vrot.slane %v849, 4
      %v852 = vrot.slane %v206, 5
      %v853 = vsel %vm839, %v851, %v852
      %v854 = vrot.slane %v207, 5
      %v855 = vrot.slane %v854, 4
      %v856 = vrot.slane %v208, 5
      %v857 = vsel %vm839, %v855, %v856
      %v858 = vrot.slane %v856, 4
      %v859 = vrot.slane %v209, 5
      %v860 = vsel %vm839, %v858, %v859
      %v861 = vrot.slane %v210, 5
      %v862 = vrot.slane %v861, 4
      %v863 = vrot.slane %v211, 5
      %v864 = vsel %vm839, %v862, %v863
      %v865 = vrot.slane %v863, 4
      %v866 = vrot.slane %v212, 5
      %v867 = vsel %vm839, %v865, %v866
      %v868 = vrot.slane %v213, 5
      %v869 = vrot.slane %v868, 4
      %v870 = vrot.slane %v214, 5
      %v871 = vsel %vm839, %v869, %v870
      %v872 = vrot.slane %v870, 4
      %v873 = vrot.slane %v215, 5
      %v874 = vsel %vm839, %v872, %v873
      %v875 = vrot.slane %v216, 5
      %v876 = vrot.slane %v875, 4
      %v877 = vrot.slane %v217, 5
      %v878 = vsel %vm839, %v876, %v877
      %v879 = vrot.slane %v877, 4
      %v880 = vrot.slane %v218, 5
      %v881 = vsel %vm839, %v879, %v880
      %v882 = vrot.slane %v219, 5
      %v883 = vrot.slane %v882, 4
      %v884 = vrot.slane %v220, 5
      %v885 = vsel %vm839, %v883, %v884
      %v886 = vrot.slane %v884, 4
      %v887 = vrot.slane %v221, 5
      %v888 = vsel %vm839, %v886, %v887
      %v889 = vrot.slane %v222, 5
      %v890 = vrot.slane %v889, 4
      %v891 = vrot.slane %v223, 5
      %v892 = vsel %vm839, %v890, %v891
      %v893 = vrot.slane %v891, 4
      %v894 = vrot.slane %v224, 5
      %v895 = vsel %vm839, %v893, %v894
      %s896 = scalar_lea.vmem %s1, 128
      %v897 = vld [vmem:[%s896] sm:$0xf]
      %v898 = vld [vmem:[%s896 + $0x4] sm:$0xf]
      %v899 = vld [vmem:[%s896 + $0x8] sm:$0xf]
      %v900 = vld [vmem:[%s896 + $0xc] sm:$0xf]
      %v901 = vld [vmem:[%s896 + $0x10] sm:$0xf]
      %v902 = vld [vmem:[%s896 + $0x14] sm:$0xf]
      %v903 = vld [vmem:[%s896 + $0x18] sm:$0xf]
      %v904 = vld [vmem:[%s896 + $0x1c] sm:$0xf]
      %v905 = vld [vmem:[%s896 + $0x20] sm:$0xf]
      %v906 = vld [vmem:[%s896 + $0x24] sm:$0xf]
      %v907 = vld [vmem:[%s896 + $0x28] sm:$0xf]
      %v908 = vld [vmem:[%s896 + $0x2c] sm:$0xf]
      %v909 = vld [vmem:[%s896 + $0x30] sm:$0xf]
      %v910 = vld [vmem:[%s896 + $0x34] sm:$0xf]
      %v911 = vld [vmem:[%s896 + $0x38] sm:$0xf]
      %v912 = vld [vmem:[%s896 + $0x3c] sm:$0xf]
      %v913 = vunpack.c.l.b16 %v843
      %v914 = vunpack.c.l.b16 %v846
      %v915 = vunpack.c.l.b16 %v850
      %v916 = vunpack.c.l.b16 %v853
      %v917 = vunpack.c.l.b16 %v857
      %v918 = vunpack.c.l.b16 %v860
      %v919 = vunpack.c.l.b16 %v864
      %v920 = vunpack.c.l.b16 %v867
      %v921 = vunpack.c.l.b16 %v871
      %v922 = vunpack.c.l.b16 %v874
      %v923 = vunpack.c.l.b16 %v878
      %v924 = vunpack.c.l.b16 %v881
      %v925 = vunpack.c.l.b16 %v885
      %v926 = vunpack.c.l.b16 %v888
      %v927 = vunpack.c.l.b16 %v892
      %v928 = vunpack.c.l.b16 %v895
      %v929 = vpack.c.b16 %v914, %v913
      %v930 = vpack.c.b16 %v916, %v915
      %v931 = vpack.c.b16 %v918, %v917
      %v932 = vpack.c.b16 %v920, %v919
      %v933 = vpack.c.b16 %v922, %v921
      %v934 = vpack.c.b16 %v924, %v923
      %v935 = vpack.c.b16 %v926, %v925
      %v936 = vpack.c.b16 %v928, %v927
      %v961 = vunpack.c.l.b16 %v897
      %v962 = vunpack.c.l.b16 %v898
      %v963 = vunpack.c.l.b16 %v899
      %v964 = vunpack.c.l.b16 %v900
      %v965 = vunpack.c.l.b16 %v901
      %v966 = vunpack.c.l.b16 %v902
      %v967 = vunpack.c.l.b16 %v903
      %v968 = vunpack.c.l.b16 %v904
      %v969 = vunpack.c.l.b16 %v905
      %v970 = vunpack.c.l.b16 %v906
      %v971 = vunpack.c.l.b16 %v907
      %v972 = vunpack.c.l.b16 %v908
      %v973 = vunpack.c.l.b16 %v909
      %v974 = vunpack.c.l.b16 %v910
      %v975 = vunpack.c.l.b16 %v911
      %v976 = vunpack.c.l.b16 %v912
      %v977 = vpack.c.b16 %v962, %v961
      %v978 = vpack.c.b16 %v964, %v963
      %v979 = vpack.c.b16 %v966, %v965
      %v980 = vpack.c.b16 %v968, %v967
      %v981 = vpack.c.b16 %v970, %v969
      %v982 = vpack.c.b16 %v972, %v971
      %v983 = vpack.c.b16 %v974, %v973
      %v984 = vpack.c.b16 %v976, %v975
      %993 = vmatprep.subr.bf16.mxu0 0
      %994 = vmatpush1.bf16.msra.mxu0 %v977
      %995 = vmatprep.subr.bf16.mxu0 0
      %996 = vmatpush1.bf16.msra.mxu0 %v978
      %997 = vmatprep.subr.bf16.mxu0 0
      %998 = vmatpush1.bf16.msra.mxu0 %v979
      %999 = vmatprep.subr.bf16.mxu0 0
      %1000 = vmatpush1.bf16.msra.mxu0 %v980
      %1001 = vmatprep.subr.bf16.mxu0 0
      %1002 = vmatpush1.bf16.msra.mxu0 %v981
      %1003 = vmatprep.subr.bf16.mxu0 0
      %1004 = vmatpush1.bf16.msra.mxu0 %v982
      %1005 = vmatprep.subr.bf16.mxu0 0
      %1006 = vmatpush1.bf16.msra.mxu0 %v983
      %1007 = vmatprep.subr.bf16.mxu0 0
      %1008 = vmatpush1.bf16.msra.mxu0 %v984
      %1009 = vmatprep.subr.bf16.mxu0 0
      %1010 = vmatpush1.bf16.msra.mxu0 0
      %1011 = vmatprep.subr.bf16.mxu0 0
      %1012 = vmatpush1.bf16.msra.mxu0 0
      %1013 = vmatprep.subr.bf16.mxu0 0
      %1014 = vmatpush1.bf16.msra.mxu0 0
      %1015 = vmatprep.subr.bf16.mxu0 0
      %1016 = vmatpush1.bf16.msra.mxu0 0
      %1017 = vmatprep.subr.bf16.mxu0 0
      %1018 = vmatpush1.bf16.msra.mxu0 0
      %1019 = vmatprep.subr.bf16.mxu0 0
      %1020 = vmatpush1.bf16.msra.mxu0 0
      %1021 = vmatprep.subr.bf16.mxu0 0
      %1022 = vmatpush1.bf16.msra.mxu0 0
      %1023 = vmatprep.subr.bf16.mxu0 0
      %1024 = vmatpush1.bf16.msra.mxu0 0
      %1025 = vmatprep.mubr.bf16.mxu0 0
      %1026 = vmatmul.mubr.bf16.gmra.mrb[0].mxu0 %v929
      %v1027 = vpop.f32.mrb[0].mxu0
      %v1028 = vadd.f32 0.0, %v1027
      %v1029 = vpop.f32.mrb[0].mxu0
      %v1030 = vpop.f32.mrb[0].mxu0
      %v1031 = vadd.f32 0.0, %v1030
      %v1032 = vpop.f32.mrb[0].mxu0
      %1033 = vmatprep.mubr.bf16.mxu0 0
      %1034 = vmatmul.mubr.bf16.gmra.mrb[0].mxu0 %v930
      %v1035 = vpop.f32.mrb[0].mxu0
      %v1036 = vadd.f32 0.0, %v1035
      %v1037 = vpop.f32.mrb[0].mxu0
      %v1038 = vpop.f32.mrb[0].mxu0
      %v1039 = vadd.f32 0.0, %v1038
      %v1040 = vpop.f32.mrb[0].mxu0
      %1041 = vmatprep.mubr.bf16.mxu0 0
      %1042 = vmatmul.mubr.bf16.gmra.mrb[0].mxu0 %v931
      %v1043 = vpop.f32.mrb[0].mxu0
      %v1044 = vadd.f32 0.0, %v1043
      %v1045 = vpop.f32.mrb[0].mxu0
      %v1046 = vpop.f32.mrb[0].mxu0
      %v1047 = vadd.f32 0.0, %v1046
      %v1048 = vpop.f32.mrb[0].mxu0
      %1049 = vmatprep.mubr.bf16.mxu0 0
      %1050 = vmatmul.mubr.bf16.gmra.mrb[0].mxu0 %v932
      %v1051 = vpop.f32.mrb[0].mxu0
      %v1052 = vadd.f32 0.0, %v1051
      %v1053 = vpop.f32.mrb[0].mxu0
      %v1054 = vpop.f32.mrb[0].mxu0
      %v1055 = vadd.f32 0.0, %v1054
      %v1056 = vpop.f32.mrb[0].mxu0
      %1057 = vmatprep.mubr.bf16.mxu0 0
      %1058 = vmatmul.mubr.bf16.gmra.mrb[0].mxu0 %v933
      %v1059 = vpop.f32.mrb[0].mxu0
      %v1060 = vadd.f32 0.0, %v1059
      %v1061 = vpop.f32.mrb[0].mxu0
      %v1062 = vpop.f32.mrb[0].mxu0
      %v1063 = vadd.f32 0.0, %v1062
      %v1064 = vpop.f32.mrb[0].mxu0
      %1065 = vmatprep.mubr.bf16.mxu0 0
      %1066 = vmatmul.mubr.bf16.gmra.mrb[0].mxu0 %v934
      %v1067 = vpop.f32.mrb[0].mxu0
      %v1068 = vadd.f32 0.0, %v1067
      %v1069 = vpop.f32.mrb[0].mxu0
      %v1070 = vpop.f32.mrb[0].mxu0
      %v1071 = vadd.f32 0.0, %v1070
      %v1072 = vpop.f32.mrb[0].mxu0
      %1073 = vmatprep.mubr.bf16.mxu0 0
      %1074 = vmatmul.mubr.bf16.gmra.mrb[0].mxu0 %v935
      %v1075 = vpop.f32.mrb[0].mxu0
      %v1076 = vadd.f32 0.0, %v1075
      %v1077 = vpop.f32.mrb[0].mxu0
      %v1078 = vpop.f32.mrb[0].mxu0
      %v1079 = vadd.f32 0.0, %v1078
      %v1080 = vpop.f32.mrb[0].mxu0
      %1081 = vmatprep.mubr.bf16.mxu0 0
      %1082 = vmatmul.mubr.bf16.gmra.mrb[0].mxu0 %v936
      %v1083 = vpop.f32.mrb[0].mxu0
      %v1084 = vadd.f32 0.0, %v1083
      %v1085 = vpop.f32.mrb[0].mxu0
      %v1086 = vpop.f32.mrb[0].mxu0
      %v1087 = vadd.f32 0.0, %v1086
      %v1088 = vpop.f32.mrb[0].mxu0
      %1089 = vdwg.mxu0
      %v1090 = vadd.f32 %v767, %v1028
      %v1091 = vadd.f32 %v770, %v1031
      %v1092 = vadd.f32 %v775, %v1036
      %v1093 = vadd.f32 %v778, %v1039
      %v1094 = vadd.f32 %v783, %v1044
      %v1095 = vadd.f32 %v786, %v1047
      %v1096 = vadd.f32 %v791, %v1052
      %v1097 = vadd.f32 %v794, %v1055
      %v1098 = vadd.f32 %v799, %v1060
      %v1099 = vadd.f32 %v802, %v1063
      %v1100 = vadd.f32 %v807, %v1068
      %v1101 = vadd.f32 %v810, %v1071
      %v1102 = vadd.f32 %v815, %v1076
      %v1103 = vadd.f32 %v818, %v1079
      %v1104 = vadd.f32 %v823, %v1084
      %v1105 = vadd.f32 %v826, %v1087
      %s1106 = scalar_lea.vmem %s1, 192
      %v1107 = vld [vmem:[%s1106] sm:$0xf]
      %v1108 = vld [vmem:[%s1106 + $0x4] sm:$0xf]
      %v1109 = vld [vmem:[%s1106 + $0x8] sm:$0xf]
      %v1110 = vld [vmem:[%s1106 + $0xc] sm:$0xf]
      %v1111 = vld [vmem:[%s1106 + $0x10] sm:$0xf]
      %v1112 = vld [vmem:[%s1106 + $0x14] sm:$0xf]
      %v1113 = vld [vmem:[%s1106 + $0x18] sm:$0xf]
      %v1114 = vld [vmem:[%s1106 + $0x1c] sm:$0xf]
      %v1115 = vld [vmem:[%s1106 + $0x20] sm:$0xf]
      %v1116 = vld [vmem:[%s1106 + $0x24] sm:$0xf]
      %v1117 = vld [vmem:[%s1106 + $0x28] sm:$0xf]
      %v1118 = vld [vmem:[%s1106 + $0x2c] sm:$0xf]
      %v1119 = vld [vmem:[%s1106 + $0x30] sm:$0xf]
      %v1120 = vld [vmem:[%s1106 + $0x34] sm:$0xf]
      %v1121 = vld [vmem:[%s1106 + $0x38] sm:$0xf]
      %v1122 = vld [vmem:[%s1106 + $0x3c] sm:$0xf]
      %v1125 = vunpack.c.l.b16 %v225
      %v1126 = vunpack.c.l.b16 %v226
      %v1127 = vpack.c.b16 %v1126, %v1125
      %v1145 = vunpack.c.l.b16 %v1107
      %v1146 = vunpack.c.l.b16 %v1108
      %v1147 = vunpack.c.l.b16 %v1109
      %v1148 = vunpack.c.l.b16 %v1110
      %v1149 = vunpack.c.l.b16 %v1111
      %v1150 = vunpack.c.l.b16 %v1112
      %v1151 = vunpack.c.l.b16 %v1113
      %v1152 = vunpack.c.l.b16 %v1114
      %v1153 = vunpack.c.l.b16 %v1115
      %v1154 = vunpack.c.l.b16 %v1116
      %v1155 = vunpack.c.l.b16 %v1117
      %v1156 = vunpack.c.l.b16 %v1118
      %v1157 = vunpack.c.l.b16 %v1119
      %v1158 = vunpack.c.l.b16 %v1120
      %v1159 = vunpack.c.l.b16 %v1121
      %v1160 = vunpack.c.l.b16 %v1122
      %v1161 = vpack.c.b16 %v1146, %v1145
      %v1162 = vpack.c.b16 %v1148, %v1147
      %v1163 = vpack.c.b16 %v1150, %v1149
      %v1164 = vpack.c.b16 %v1152, %v1151
      %v1165 = vpack.c.b16 %v1154, %v1153
      %v1166 = vpack.c.b16 %v1156, %v1155
      %v1167 = vpack.c.b16 %v1158, %v1157
      %v1168 = vpack.c.b16 %v1160, %v1159
      %1177 = vmatprep.subr.bf16.mxu0 0
      %1178 = vmatpush1.bf16.msra.mxu0 %v1161
      %1179 = vmatprep.subr.bf16.mxu0 0
      %1180 = vmatpush1.bf16.msra.mxu0 %v1162
      %1181 = vmatprep.subr.bf16.mxu0 0
      %1182 = vmatpush1.bf16.msra.mxu0 %v1163
      %1183 = vmatprep.subr.bf16.mxu0 0
      %1184 = vmatpush1.bf16.msra.mxu0 %v1164
      %1185 = vmatprep.subr.bf16.mxu0 0
      %1186 = vmatpush1.bf16.msra.mxu0 %v1165
      %1187 = vmatprep.subr.bf16.mxu0 0
      %1188 = vmatpush1.bf16.msra.mxu0 %v1166
      %1189 = vmatprep.subr.bf16.mxu0 0
      %1190 = vmatpush1.bf16.msra.mxu0 %v1167
      %1191 = vmatprep.subr.bf16.mxu0 0
      %1192 = vmatpush1.bf16.msra.mxu0 %v1168
      %1193 = vmatprep.subr.bf16.mxu0 0
      %1194 = vmatpush1.bf16.msra.mxu0 0
      %1195 = vmatprep.subr.bf16.mxu0 0
      %1196 = vmatpush1.bf16.msra.mxu0 0
      %1197 = vmatprep.subr.bf16.mxu0 0
      %1198 = vmatpush1.bf16.msra.mxu0 0
      %1199 = vmatprep.subr.bf16.mxu0 0
      %1200 = vmatpush1.bf16.msra.mxu0 0
      %1201 = vmatprep.subr.bf16.mxu0 0
      %1202 = vmatpush1.bf16.msra.mxu0 0
      %1203 = vmatprep.subr.bf16.mxu0 0
      %1204 = vmatpush1.bf16.msra.mxu0 0
      %1205 = vmatprep.subr.bf16.mxu0 0
      %1206 = vmatpush1.bf16.msra.mxu0 0
      %1207 = vmatprep.subr.bf16.mxu0 0
      %1208 = vmatpush1.bf16.msra.mxu0 0
      %1209 = vmatprep.mubr.bf16.mxu0 0
      %1210 = vmatmul.mubr.bf16.gmra.mrb[0].mxu0 %v669
      %v1211 = vpop.f32.mrb[0].mxu0
      %v1212 = vadd.f32 0.0, %v1211
      %v1213 = vpop.f32.mrb[0].mxu0
      %v1214 = vpop.f32.mrb[0].mxu0
      %v1215 = vadd.f32 0.0, %v1214
      %v1216 = vpop.f32.mrb[0].mxu0
      %1217 = vmatprep.mubr.bf16.mxu0 0
      %1218 = vmatmul.mubr.bf16.gmra.mrb[0].mxu0 %v670
      %v1219 = vpop.f32.mrb[0].mxu0
      %v1220 = vadd.f32 0.0, %v1219
      %v1221 = vpop.f32.mrb[0].mxu0
      %v1222 = vpop.f32.mrb[0].mxu0
      %v1223 = vadd.f32 0.0, %v1222
      %v1224 = vpop.f32.mrb[0].mxu0
      %1225 = vmatprep.mubr.bf16.mxu0 0
      %1226 = vmatmul.mubr.bf16.gmra.mrb[0].mxu0 %v671
      %v1227 = vpop.f32.mrb[0].mxu0
      %v1228 = vadd.f32 0.0, %v1227
      %v1229 = vpop.f32.mrb[0].mxu0
      %v1230 = vpop.f32.mrb[0].mxu0
      %v1231 = vadd.f32 0.0, %v1230
      %v1232 = vpop.f32.mrb[0].mxu0
      %1233 = vmatprep.mubr.bf16.mxu0 0
      %1234 = vmatmul.mubr.bf16.gmra.mrb[0].mxu0 %v672
      %v1235 = vpop.f32.mrb[0].mxu0
      %v1236 = vadd.f32 0.0, %v1235
      %v1237 = vpop.f32.mrb[0].mxu0
      %v1238 = vpop.f32.mrb[0].mxu0
      %v1239 = vadd.f32 0.0, %v1238
      %v1240 = vpop.f32.mrb[0].mxu0
      %1241 = vmatprep.mubr.bf16.mxu0 0
      %1242 = vmatmul.mubr.bf16.gmra.mrb[0].mxu0 %v673
      %v1243 = vpop.f32.mrb[0].mxu0
      %v1244 = vadd.f32 0.0, %v1243
      %v1245 = vpop.f32.mrb[0].mxu0
      %v1246 = vpop.f32.mrb[0].mxu0
      %v1247 = vadd.f32 0.0, %v1246
      %v1248 = vpop.f32.mrb[0].mxu0
      %1249 = vmatprep.mubr.bf16.mxu0 0
      %1250 = vmatmul.mubr.bf16.gmra.mrb[0].mxu0 %v674
      %v1251 = vpop.f32.mrb[0].mxu0
      %v1252 = vadd.f32 0.0, %v1251
      %v1253 = vpop.f32.mrb[0].mxu0
      %v1254 = vpop.f32.mrb[0].mxu0
      %v1255 = vadd.f32 0.0, %v1254
      %v1256 = vpop.f32.mrb[0].mxu0
      %1257 = vmatprep.mubr.bf16.mxu0 0
      %1258 = vmatmul.mubr.bf16.gmra.mrb[0].mxu0 %v675
      %v1259 = vpop.f32.mrb[0].mxu0
      %v1260 = vadd.f32 0.0, %v1259
      %v1261 = vpop.f32.mrb[0].mxu0
      %v1262 = vpop.f32.mrb[0].mxu0
      %v1263 = vadd.f32 0.0, %v1262
      %v1264 = vpop.f32.mrb[0].mxu0
      %1265 = vmatprep.mubr.bf16.mxu0 0
      %1266 = vmatmul.mubr.bf16.gmra.mrb[0].mxu0 %v1127
      %v1267 = vpop.f32.mrb[0].mxu0
      %v1268 = vadd.f32 0.0, %v1267
      %v1269 = vpop.f32.mrb[0].mxu0
      %v1270 = vpop.f32.mrb[0].mxu0
      %v1271 = vadd.f32 0.0, %v1270
      %v1272 = vpop.f32.mrb[0].mxu0
      %1273 = vdwg.mxu0
      %v1274 = vadd.f32 %v1090, %v1212
      %v1275 = vadd.f32 %v1091, %v1215
      %v1276 = vadd.f32 %v1092, %v1220
      %v1277 = vadd.f32 %v1093, %v1223
      %v1278 = vadd.f32 %v1094, %v1228
      %v1279 = vadd.f32 %v1095, %v1231
      %v1280 = vadd.f32 %v1096, %v1236
      %v1281 = vadd.f32 %v1097, %v1239
      %v1282 = vadd.f32 %v1098, %v1244
      %v1283 = vadd.f32 %v1099, %v1247
      %v1284 = vadd.f32 %v1100, %v1252
      %v1285 = vadd.f32 %v1101, %v1255
      %v1286 = vadd.f32 %v1102, %v1260
      %v1287 = vadd.f32 %v1103, %v1263
      %v1288 = vadd.f32 %v1104, %v1268
      %v1289 = vadd.f32 %v1105, %v1271
      %v1291 = vshrl.u32 %v225, 16
      %v1293 = vrot.slane %v1291, 4
      %v1294 = vshll.u32 %v225, 16
      %v1296 = vrot.slane %v1294, 5
      %v1297 = vor.u32 %v1293, %v1296
      %v1298 = vrot.slane %v1297, 4
      %v1300 = vshll.u32 %v226, 16
      %v1302 = vrot.slane %v1300, 5
      %v1303 = vsel %vm249, %v1298, %v1302
      %v1304 = vshrl.u32 %v226, 16
      %v1306 = vrot.slane %v1304, 4
      %v1307 = vor.u32 %v1306, %v1302
      %v1308 = vrot.slane %v1307, 4
      %v1310 = vshll.u32 %v227, 16
      %v1312 = vrot.slane %v1310, 5
      %v1313 = vsel %vm249, %v1308, %v1312
      %s1314 = scalar_lea.vmem %s1, 256
      %v1315 = vld [vmem:[%s1314] sm:$0xf]
      %v1316 = vld [vmem:[%s1314 + $0x4] sm:$0xf]
      %v1317 = vld [vmem:[%s1314 + $0x8] sm:$0xf]
      %v1318 = vld [vmem:[%s1314 + $0xc] sm:$0xf]
      %v1319 = vld [vmem:[%s1314 + $0x10] sm:$0xf]
      %v1320 = vld [vmem:[%s1314 + $0x14] sm:$0xf]
      %v1321 = vld [vmem:[%s1314 + $0x18] sm:$0xf]
      %v1322 = vld [vmem:[%s1314 + $0x1c] sm:$0xf]
      %v1323 = vld [vmem:[%s1314 + $0x20] sm:$0xf]
      %v1324 = vld [vmem:[%s1314 + $0x24] sm:$0xf]
      %v1325 = vld [vmem:[%s1314 + $0x28] sm:$0xf]
      %v1326 = vld [vmem:[%s1314 + $0x2c] sm:$0xf]
      %v1327 = vld [vmem:[%s1314 + $0x30] sm:$0xf]
      %v1328 = vld [vmem:[%s1314 + $0x34] sm:$0xf]
      %v1329 = vld [vmem:[%s1314 + $0x38] sm:$0xf]
      %v1330 = vld [vmem:[%s1314 + $0x3c] sm:$0xf]
      %v1331 = vunpack.c.l.b16 %v1303
      %v1332 = vunpack.c.l.b16 %v1313
      %v1333 = vpack.c.b16 %v1332, %v1331
      %v1351 = vunpack.c.l.b16 %v1315
      %v1352 = vunpack.c.l.b16 %v1316
      %v1353 = vunpack.c.l.b16 %v1317
      %v1354 = vunpack.c.l.b16 %v1318
      %v1355 = vunpack.c.l.b16 %v1319
      %v1356 = vunpack.c.l.b16 %v1320
      %v1357 = vunpack.c.l.b16 %v1321
      %v1358 = vunpack.c.l.b16 %v1322
      %v1359 = vunpack.c.l.b16 %v1323
      %v1360 = vunpack.c.l.b16 %v1324
      %v1361 = vunpack.c.l.b16 %v1325
      %v1362 = vunpack.c.l.b16 %v1326
      %v1363 = vunpack.c.l.b16 %v1327
      %v1364 = vunpack.c.l.b16 %v1328
      %v1365 = vunpack.c.l.b16 %v1329
      %v1366 = vunpack.c.l.b16 %v1330
      %v1367 = vpack.c.b16 %v1352, %v1351
      %v1368 = vpack.c.b16 %v1354, %v1353
      %v1369 = vpack.c.b16 %v1356, %v1355
      %v1370 = vpack.c.b16 %v1358, %v1357
      %v1371 = vpack.c.b16 %v1360, %v1359
      %v1372 = vpack.c.b16 %v1362, %v1361
      %v1373 = vpack.c.b16 %v1364, %v1363
      %v1374 = vpack.c.b16 %v1366, %v1365
      %1383 = vmatprep.subr.bf16.mxu0 0
      %1384 = vmatpush1.bf16.msra.mxu0 %v1367
      %1385 = vmatprep.subr.bf16.mxu0 0
      %1386 = vmatpush1.bf16.msra.mxu0 %v1368
      %1387 = vmatprep.subr.bf16.mxu0 0
      %1388 = vmatpush1.bf16.msra.mxu0 %v1369
      %1389 = vmatprep.subr.bf16.mxu0 0
      %1390 = vmatpush1.bf16.msra.mxu0 %v1370
      %1391 = vmatprep.subr.bf16.mxu0 0
      %1392 = vmatpush1.bf16.msra.mxu0 %v1371
      %1393 = vmatprep.subr.bf16.mxu0 0
      %1394 = vmatpush1.bf16.msra.mxu0 %v1372
      %1395 = vmatprep.subr.bf16.mxu0 0
      %1396 = vmatpush1.bf16.msra.mxu0 %v1373
      %1397 = vmatprep.subr.bf16.mxu0 0
      %1398 = vmatpush1.bf16.msra.mxu0 %v1374
      %1399 = vmatprep.subr.bf16.mxu0 0
      %1400 = vmatpush1.bf16.msra.mxu0 0
      %1401 = vmatprep.subr.bf16.mxu0 0
      %1402 = vmatpush1.bf16.msra.mxu0 0
      %1403 = vmatprep.subr.bf16.mxu0 0
      %1404 = vmatpush1.bf16.msra.mxu0 0
      %1405 = vmatprep.subr.bf16.mxu0 0
      %1406 = vmatpush1.bf16.msra.mxu0 0
      %1407 = vmatprep.subr.bf16.mxu0 0
      %1408 = vmatpush1.bf16.msra.mxu0 0
      %1409 = vmatprep.subr.bf16.mxu0 0
      %1410 = vmatpush1.bf16.msra.mxu0 0
      %1411 = vmatprep.subr.bf16.mxu0 0
      %1412 = vmatpush1.bf16.msra.mxu0 0
      %1413 = vmatprep.subr.bf16.mxu0 0
      %1414 = vmatpush1.bf16.msra.mxu0 0
      %1415 = vmatprep.mubr.bf16.mxu0 0
      %1416 = vmatmul.mubr.bf16.gmra.mrb[0].mxu0 %v476
      %v1417 = vpop.f32.mrb[0].mxu0
      %v1418 = vadd.f32 0.0, %v1417
      %v1419 = vpop.f32.mrb[0].mxu0
      %v1420 = vpop.f32.mrb[0].mxu0
      %v1421 = vadd.f32 0.0, %v1420
      %v1422 = vpop.f32.mrb[0].mxu0
      %1423 = vmatprep.mubr.bf16.mxu0 0
      %1424 = vmatmul.mubr.bf16.gmra.mrb[0].mxu0 %v477
      %v1425 = vpop.f32.mrb[0].mxu0
      %v1426 = vadd.f32 0.0, %v1425
      %v1427 = vpop.f32.mrb[0].mxu0
      %v1428 = vpop.f32.mrb[0].mxu0
      %v1429 = vadd.f32 0.0, %v1428
      %v1430 = vpop.f32.mrb[0].mxu0
      %1431 = vmatprep.mubr.bf16.mxu0 0
      %1432 = vmatmul.mubr.bf16.gmra.mrb[0].mxu0 %v478
      %v1433 = vpop.f32.mrb[0].mxu0
      %v1434 = vadd.f32 0.0, %v1433
      %v1435 = vpop.f32.mrb[0].mxu0
      %v1436 = vpop.f32.mrb[0].mxu0
      %v1437 = vadd.f32 0.0, %v1436
      %v1438 = vpop.f32.mrb[0].mxu0
      %1439 = vmatprep.mubr.bf16.mxu0 0
      %1440 = vmatmul.mubr.bf16.gmra.mrb[0].mxu0 %v479
      %v1441 = vpop.f32.mrb[0].mxu0
      %v1442 = vadd.f32 0.0, %v1441
      %v1443 = vpop.f32.mrb[0].mxu0
      %v1444 = vpop.f32.mrb[0].mxu0
      %v1445 = vadd.f32 0.0, %v1444
      %v1446 = vpop.f32.mrb[0].mxu0
      %1447 = vmatprep.mubr.bf16.mxu0 0
      %1448 = vmatmul.mubr.bf16.gmra.mrb[0].mxu0 %v480
      %v1449 = vpop.f32.mrb[0].mxu0
      %v1450 = vadd.f32 0.0, %v1449
      %v1451 = vpop.f32.mrb[0].mxu0
      %v1452 = vpop.f32.mrb[0].mxu0
      %v1453 = vadd.f32 0.0, %v1452
      %v1454 = vpop.f32.mrb[0].mxu0
      %1455 = vmatprep.mubr.bf16.mxu0 0
      %1456 = vmatmul.mubr.bf16.gmra.mrb[0].mxu0 %v481
      %v1457 = vpop.f32.mrb[0].mxu0
      %v1458 = vadd.f32 0.0, %v1457
      %v1459 = vpop.f32.mrb[0].mxu0
      %v1460 = vpop.f32.mrb[0].mxu0
      %v1461 = vadd.f32 0.0, %v1460
      %v1462 = vpop.f32.mrb[0].mxu0
      %1463 = vmatprep.mubr.bf16.mxu0 0
      %1464 = vmatmul.mubr.bf16.gmra.mrb[0].mxu0 %v482
      %v1465 = vpop.f32.mrb[0].mxu0
      %v1466 = vadd.f32 0.0, %v1465
      %v1467 = vpop.f32.mrb[0].mxu0
      %v1468 = vpop.f32.mrb[0].mxu0
      %v1469 = vadd.f32 0.0, %v1468
      %v1470 = vpop.f32.mrb[0].mxu0
      %1471 = vmatprep.mubr.bf16.mxu0 0
      %1472 = vmatmul.mubr.bf16.gmra.mrb[0].mxu0 %v1333
      %v1473 = vpop.f32.mrb[0].mxu0
      %v1474 = vadd.f32 0.0, %v1473
      %v1475 = vpop.f32.mrb[0].mxu0
      %v1476 = vpop.f32.mrb[0].mxu0
      %v1477 = vadd.f32 0.0, %v1476
      %v1478 = vpop.f32.mrb[0].mxu0
      %1479 = vdwg.mxu0
      %v1480 = vadd.f32 %v1274, %v1418
      %v1481 = vadd.f32 %v1275, %v1421
      %v1482 = vadd.f32 %v1276, %v1426
      %v1483 = vadd.f32 %v1277, %v1429
      %v1484 = vadd.f32 %v1278, %v1434
      %v1485 = vadd.f32 %v1279, %v1437
      %v1486 = vadd.f32 %v1280, %v1442
      %v1487 = vadd.f32 %v1281, %v1445
      %v1488 = vadd.f32 %v1282, %v1450
      %v1489 = vadd.f32 %v1283, %v1453
      %v1490 = vadd.f32 %v1284, %v1458
      %v1491 = vadd.f32 %v1285, %v1461
      %v1492 = vadd.f32 %v1286, %v1466
      %v1493 = vadd.f32 %v1287, %v1469
      %v1494 = vadd.f32 %v1288, %v1474
      %v1495 = vadd.f32 %v1289, %v1477
      %v1497 = vrot.slane %v225, 5
      %v1498 = vrot.slane %v1497, 4
      %v1499 = vrot.slane %v226, 5
      %v1500 = vsel %vm839, %v1498, %v1499
      %v1501 = vrot.slane %v1499, 4
      %v1502 = vrot.slane %v227, 5
      %v1503 = vsel %vm839, %v1501, %v1502
      %s1504 = scalar_lea.vmem %s1, 320
      %v1505 = vld [vmem:[%s1504] sm:$0xf]
      %v1506 = vld [vmem:[%s1504 + $0x4] sm:$0xf]
      %v1507 = vld [vmem:[%s1504 + $0x8] sm:$0xf]
      %v1508 = vld [vmem:[%s1504 + $0xc] sm:$0xf]
      %v1509 = vld [vmem:[%s1504 + $0x10] sm:$0xf]
      %v1510 = vld [vmem:[%s1504 + $0x14] sm:$0xf]
      %v1511 = vld [vmem:[%s1504 + $0x18] sm:$0xf]
      %v1512 = vld [vmem:[%s1504 + $0x1c] sm:$0xf]
      %v1513 = vld [vmem:[%s1504 + $0x20] sm:$0xf]
      %v1514 = vld [vmem:[%s1504 + $0x24] sm:$0xf]
      %v1515 = vld [vmem:[%s1504 + $0x28] sm:$0xf]
      %v1516 = vld [vmem:[%s1504 + $0x2c] sm:$0xf]
      %v1517 = vld [vmem:[%s1504 + $0x30] sm:$0xf]
      %v1518 = vld [vmem:[%s1504 + $0x34] sm:$0xf]
      %v1519 = vld [vmem:[%s1504 + $0x38] sm:$0xf]
      %v1520 = vld [vmem:[%s1504 + $0x3c] sm:$0xf]
      %v1521 = vunpack.c.l.b16 %v1500
      %v1522 = vunpack.c.l.b16 %v1503
      %v1523 = vpack.c.b16 %v1522, %v1521
      %v1541 = vunpack.c.l.b16 %v1505
      %v1542 = vunpack.c.l.b16 %v1506
      %v1543 = vunpack.c.l.b16 %v1507
      %v1544 = vunpack.c.l.b16 %v1508
      %v1545 = vunpack.c.l.b16 %v1509
      %v1546 = vunpack.c.l.b16 %v1510
      %v1547 = vunpack.c.l.b16 %v1511
      %v1548 = vunpack.c.l.b16 %v1512
      %v1549 = vunpack.c.l.b16 %v1513
      %v1550 = vunpack.c.l.b16 %v1514
      %v1551 = vunpack.c.l.b16 %v1515
      %v1552 = vunpack.c.l.b16 %v1516
      %v1553 = vunpack.c.l.b16 %v1517
      %v1554 = vunpack.c.l.b16 %v1518
      %v1555 = vunpack.c.l.b16 %v1519
      %v1556 = vunpack.c.l.b16 %v1520
      %v1557 = vpack.c.b16 %v1542, %v1541
      %v1558 = vpack.c.b16 %v1544, %v1543
      %v1559 = vpack.c.b16 %v1546, %v1545
      %v1560 = vpack.c.b16 %v1548, %v1547
      %v1561 = vpack.c.b16 %v1550, %v1549
      %v1562 = vpack.c.b16 %v1552, %v1551
      %v1563 = vpack.c.b16 %v1554, %v1553
      %v1564 = vpack.c.b16 %v1556, %v1555
      %1573 = vmatprep.subr.bf16.mxu0 0
      %1574 = vmatpush1.bf16.msra.mxu0 %v1557
      %1575 = vmatprep.subr.bf16.mxu0 0
      %1576 = vmatpush1.bf16.msra.mxu0 %v1558
      %1577 = vmatprep.subr.bf16.mxu0 0
      %1578 = vmatpush1.bf16.msra.mxu0 %v1559
      %1579 = vmatprep.subr.bf16.mxu0 0
      %1580 = vmatpush1.bf16.msra.mxu0 %v1560
      %1581 = vmatprep.subr.bf16.mxu0 0
      %1582 = vmatpush1.bf16.msra.mxu0 %v1561
      %1583 = vmatprep.subr.bf16.mxu0 0
      %1584 = vmatpush1.bf16.msra.mxu0 %v1562
      %1585 = vmatprep.subr.bf16.mxu0 0
      %1586 = vmatpush1.bf16.msra.mxu0 %v1563
      %1587 = vmatprep.subr.bf16.mxu0 0
      %1588 = vmatpush1.bf16.msra.mxu0 %v1564
      %1589 = vmatprep.subr.bf16.mxu0 0
      %1590 = vmatpush1.bf16.msra.mxu0 0
      %1591 = vmatprep.subr.bf16.mxu0 0
      %1592 = vmatpush1.bf16.msra.mxu0 0
      %1593 = vmatprep.subr.bf16.mxu0 0
      %1594 = vmatpush1.bf16.msra.mxu0 0
      %1595 = vmatprep.subr.bf16.mxu0 0
      %1596 = vmatpush1.bf16.msra.mxu0 0
      %1597 = vmatprep.subr.bf16.mxu0 0
      %1598 = vmatpush1.bf16.msra.mxu0 0
      %1599 = vmatprep.subr.bf16.mxu0 0
      %1600 = vmatpush1.bf16.msra.mxu0 0
      %1601 = vmatprep.subr.bf16.mxu0 0
      %1602 = vmatpush1.bf16.msra.mxu0 0
      %1603 = vmatprep.subr.bf16.mxu0 0
      %1604 = vmatpush1.bf16.msra.mxu0 0
      %1605 = vmatprep.mubr.bf16.mxu0 0
      %1606 = vmatmul.mubr.bf16.gmra.mrb[0].mxu0 %v930
      %v1607 = vpop.f32.mrb[0].mxu0
      %v1608 = vadd.f32 0.0, %v1607
      %v1609 = vpop.f32.mrb[0].mxu0
      %v1610 = vpop.f32.mrb[0].mxu0
      %v1611 = vadd.f32 0.0, %v1610
      %v1612 = vpop.f32.mrb[0].mxu0
      %1613 = vmatprep.mubr.bf16.mxu0 0
      %1614 = vmatmul.mubr.bf16.gmra.mrb[0].mxu0 %v931
      %v1615 = vpop.f32.mrb[0].mxu0
      %v1616 = vadd.f32 0.0, %v1615
      %v1617 = vpop.f32.mrb[0].mxu0
      %v1618 = vpop.f32.mrb[0].mxu0
      %v1619 = vadd.f32 0.0, %v1618
      %v1620 = vpop.f32.mrb[0].mxu0
      %1621 = vmatprep.mubr.bf16.mxu0 0
      %1622 = vmatmul.mubr.bf16.gmra.mrb[0].mxu0 %v932
      %v1623 = vpop.f32.mrb[0].mxu0
      %v1624 = vadd.f32 0.0, %v1623
      %v1625 = vpop.f32.mrb[0].mxu0
      %v1626 = vpop.f32.mrb[0].mxu0
      %v1627 = vadd.f32 0.0, %v1626
      %v1628 = vpop.f32.mrb[0].mxu0
      %1629 = vmatprep.mubr.bf16.mxu0 0
      %1630 = vmatmul.mubr.bf16.gmra.mrb[0].mxu0 %v933
      %v1631 = vpop.f32.mrb[0].mxu0
      %v1632 = vadd.f32 0.0, %v1631
      %v1633 = vpop.f32.mrb[0].mxu0
      %v1634 = vpop.f32.mrb[0].mxu0
      %v1635 = vadd.f32 0.0, %v1634
      %v1636 = vpop.f32.mrb[0].mxu0
      %1637 = vmatprep.mubr.bf16.mxu0 0
      %1638 = vmatmul.mubr.bf16.gmra.mrb[0].mxu0 %v934
      %v1639 = vpop.f32.mrb[0].mxu0
      %v1640 = vadd.f32 0.0, %v1639
      %v1641 = vpop.f32.mrb[0].mxu0
      %v1642 = vpop.f32.mrb[0].mxu0
      %v1643 = vadd.f32 0.0, %v1642
      %v1644 = vpop.f32.mrb[0].mxu0
      %1645 = vmatprep.mubr.bf16.mxu0 0
      %1646 = vmatmul.mubr.bf16.gmra.mrb[0].mxu0 %v935
      %v1647 = vpop.f32.mrb[0].mxu0
      %v1648 = vadd.f32 0.0, %v1647
      %v1649 = vpop.f32.mrb[0].mxu0
      %v1650 = vpop.f32.mrb[0].mxu0
      %v1651 = vadd.f32 0.0, %v1650
      %v1652 = vpop.f32.mrb[0].mxu0
      %1653 = vmatprep.mubr.bf16.mxu0 0
      %1654 = vmatmul.mubr.bf16.gmra.mrb[0].mxu0 %v936
      %v1655 = vpop.f32.mrb[0].mxu0
      %v1656 = vadd.f32 0.0, %v1655
      %v1657 = vpop.f32.mrb[0].mxu0
      %v1658 = vpop.f32.mrb[0].mxu0
      %v1659 = vadd.f32 0.0, %v1658
      %v1660 = vpop.f32.mrb[0].mxu0
      %1661 = vmatprep.mubr.bf16.mxu0 0
      %1662 = vmatmul.mubr.bf16.gmra.mrb[0].mxu0 %v1523
      %v1663 = vpop.f32.mrb[0].mxu0
      %v1664 = vadd.f32 0.0, %v1663
      %v1665 = vpop.f32.mrb[0].mxu0
      %v1666 = vpop.f32.mrb[0].mxu0
      %v1667 = vadd.f32 0.0, %v1666
      %v1668 = vpop.f32.mrb[0].mxu0
      %1669 = vdwg.mxu0
      %v1670 = vadd.f32 %v1480, %v1608
      %v1671 = vadd.f32 %v1481, %v1611
      %v1672 = vadd.f32 %v1482, %v1616
      %v1673 = vadd.f32 %v1483, %v1619
      %v1674 = vadd.f32 %v1484, %v1624
      %v1675 = vadd.f32 %v1485, %v1627
      %v1676 = vadd.f32 %v1486, %v1632
      %v1677 = vadd.f32 %v1487, %v1635
      %v1678 = vadd.f32 %v1488, %v1640
      %v1679 = vadd.f32 %v1489, %v1643
      %v1680 = vadd.f32 %v1490, %v1648
      %v1681 = vadd.f32 %v1491, %v1651
      %v1682 = vadd.f32 %v1492, %v1656
      %v1683 = vadd.f32 %v1493, %v1659
      %v1684 = vadd.f32 %v1494, %v1664
      %v1685 = vadd.f32 %v1495, %v1667
      %s1686 = scalar_lea.vmem %s1, 384
      %v1687 = vld [vmem:[%s1686] sm:$0xf]
      %v1688 = vld [vmem:[%s1686 + $0x4] sm:$0xf]
      %v1689 = vld [vmem:[%s1686 + $0x8] sm:$0xf]
      %v1690 = vld [vmem:[%s1686 + $0xc] sm:$0xf]
      %v1691 = vld [vmem:[%s1686 + $0x10] sm:$0xf]
      %v1692 = vld [vmem:[%s1686 + $0x14] sm:$0xf]
      %v1693 = vld [vmem:[%s1686 + $0x18] sm:$0xf]
      %v1694 = vld [vmem:[%s1686 + $0x1c] sm:$0xf]
      %v1695 = vld [vmem:[%s1686 + $0x20] sm:$0xf]
      %v1696 = vld [vmem:[%s1686 + $0x24] sm:$0xf]
      %v1697 = vld [vmem:[%s1686 + $0x28] sm:$0xf]
      %v1698 = vld [vmem:[%s1686 + $0x2c] sm:$0xf]
      %v1699 = vld [vmem:[%s1686 + $0x30] sm:$0xf]
      %v1700 = vld [vmem:[%s1686 + $0x34] sm:$0xf]
      %v1701 = vld [vmem:[%s1686 + $0x38] sm:$0xf]
      %v1702 = vld [vmem:[%s1686 + $0x3c] sm:$0xf]
      %v1705 = vunpack.c.l.b16 %v228
      %v1706 = vunpack.c.l.b16 %v229
      %v1707 = vpack.c.b16 %v1706, %v1705
      %v1725 = vunpack.c.l.b16 %v1687
      %v1726 = vunpack.c.l.b16 %v1688
      %v1727 = vunpack.c.l.b16 %v1689
      %v1728 = vunpack.c.l.b16 %v1690
      %v1729 = vunpack.c.l.b16 %v1691
      %v1730 = vunpack.c.l.b16 %v1692
      %v1731 = vunpack.c.l.b16 %v1693
      %v1732 = vunpack.c.l.b16 %v1694
      %v1733 = vunpack.c.l.b16 %v1695
      %v1734 = vunpack.c.l.b16 %v1696
      %v1735 = vunpack.c.l.b16 %v1697
      %v1736 = vunpack.c.l.b16 %v1698
      %v1737 = vunpack.c.l.b16 %v1699
      %v1738 = vunpack.c.l.b16 %v1700
      %v1739 = vunpack.c.l.b16 %v1701
      %v1740 = vunpack.c.l.b16 %v1702
      %v1741 = vpack.c.b16 %v1726, %v1725
      %v1742 = vpack.c.b16 %v1728, %v1727
      %v1743 = vpack.c.b16 %v1730, %v1729
      %v1744 = vpack.c.b16 %v1732, %v1731
      %v1745 = vpack.c.b16 %v1734, %v1733
      %v1746 = vpack.c.b16 %v1736, %v1735
      %v1747 = vpack.c.b16 %v1738, %v1737
      %v1748 = vpack.c.b16 %v1740, %v1739
      %1757 = vmatprep.subr.bf16.mxu0 0
      %1758 = vmatpush1.bf16.msra.mxu0 %v1741
      %1759 = vmatprep.subr.bf16.mxu0 0
      %1760 = vmatpush1.bf16.msra.mxu0 %v1742
      %1761 = vmatprep.subr.bf16.mxu0 0
      %1762 = vmatpush1.bf16.msra.mxu0 %v1743
      %1763 = vmatprep.subr.bf16.mxu0 0
      %1764 = vmatpush1.bf16.msra.mxu0 %v1744
      %1765 = vmatprep.subr.bf16.mxu0 0
      %1766 = vmatpush1.bf16.msra.mxu0 %v1745
      %1767 = vmatprep.subr.bf16.mxu0 0
      %1768 = vmatpush1.bf16.msra.mxu0 %v1746
      %1769 = vmatprep.subr.bf16.mxu0 0
      %1770 = vmatpush1.bf16.msra.mxu0 %v1747
      %1771 = vmatprep.subr.bf16.mxu0 0
      %1772 = vmatpush1.bf16.msra.mxu0 %v1748
      %1773 = vmatprep.subr.bf16.mxu0 0
      %1774 = vmatpush1.bf16.msra.mxu0 0
      %1775 = vmatprep.subr.bf16.mxu0 0
      %1776 = vmatpush1.bf16.msra.mxu0 0
      %1777 = vmatprep.subr.bf16.mxu0 0
      %1778 = vmatpush1.bf16.msra.mxu0 0
      %1779 = vmatprep.subr.bf16.mxu0 0
      %1780 = vmatpush1.bf16.msra.mxu0 0
      %1781 = vmatprep.subr.bf16.mxu0 0
      %1782 = vmatpush1.bf16.msra.mxu0 0
      %1783 = vmatprep.subr.bf16.mxu0 0
      %1784 = vmatpush1.bf16.msra.mxu0 0
      %1785 = vmatprep.subr.bf16.mxu0 0
      %1786 = vmatpush1.bf16.msra.mxu0 0
      %1787 = vmatprep.subr.bf16.mxu0 0
      %1788 = vmatpush1.bf16.msra.mxu0 0
      %1789 = vmatprep.mubr.bf16.mxu0 0
      %1790 = vmatmul.mubr.bf16.gmra.mrb[0].mxu0 %v670
      %v1791 = vpop.f32.mrb[0].mxu0
      %v1792 = vadd.f32 0.0, %v1791
      %v1793 = vpop.f32.mrb[0].mxu0
      %v1794 = vpop.f32.mrb[0].mxu0
      %v1795 = vadd.f32 0.0, %v1794
      %v1796 = vpop.f32.mrb[0].mxu0
      %1797 = vmatprep.mubr.bf16.mxu0 0
      %1798 = vmatmul.mubr.bf16.gmra.mrb[0].mxu0 %v671
      %v1799 = vpop.f32.mrb[0].mxu0
      %v1800 = vadd.f32 0.0, %v1799
      %v1801 = vpop.f32.mrb[0].mxu0
      %v1802 = vpop.f32.mrb[0].mxu0
      %v1803 = vadd.f32 0.0, %v1802
      %v1804 = vpop.f32.mrb[0].mxu0
      %1805 = vmatprep.mubr.bf16.mxu0 0
      %1806 = vmatmul.mubr.bf16.gmra.mrb[0].mxu0 %v672
      %v1807 = vpop.f32.mrb[0].mxu0
      %v1808 = vadd.f32 0.0, %v1807
      %v1809 = vpop.f32.mrb[0].mxu0
      %v1810 = vpop.f32.mrb[0].mxu0
      %v1811 = vadd.f32 0.0, %v1810
      %v1812 = vpop.f32.mrb[0].mxu0
      %1813 = vmatprep.mubr.bf16.mxu0 0
      %1814 = vmatmul.mubr.bf16.gmra.mrb[0].mxu0 %v673
      %v1815 = vpop.f32.mrb[0].mxu0
      %v1816 = vadd.f32 0.0, %v1815
      %v1817 = vpop.f32.mrb[0].mxu0
      %v1818 = vpop.f32.mrb[0].mxu0
      %v1819 = vadd.f32 0.0, %v1818
      %v1820 = vpop.f32.mrb[0].mxu0
      %1821 = vmatprep.mubr.bf16.mxu0 0
      %1822 = vmatmul.mubr.bf16.gmra.mrb[0].mxu0 %v674
      %v1823 = vpop.f32.mrb[0].mxu0
      %v1824 = vadd.f32 0.0, %v1823
      %v1825 = vpop.f32.mrb[0].mxu0
      %v1826 = vpop.f32.mrb[0].mxu0
      %v1827 = vadd.f32 0.0, %v1826
      %v1828 = vpop.f32.mrb[0].mxu0
      %1829 = vmatprep.mubr.bf16.mxu0 0
      %1830 = vmatmul.mubr.bf16.gmra.mrb[0].mxu0 %v675
      %v1831 = vpop.f32.mrb[0].mxu0
      %v1832 = vadd.f32 0.0, %v1831
      %v1833 = vpop.f32.mrb[0].mxu0
      %v1834 = vpop.f32.mrb[0].mxu0
      %v1835 = vadd.f32 0.0, %v1834
      %v1836 = vpop.f32.mrb[0].mxu0
      %1837 = vmatprep.mubr.bf16.mxu0 0
      %1838 = vmatmul.mubr.bf16.gmra.mrb[0].mxu0 %v1127
      %v1839 = vpop.f32.mrb[0].mxu0
      %v1840 = vadd.f32 0.0, %v1839
      %v1841 = vpop.f32.mrb[0].mxu0
      %v1842 = vpop.f32.mrb[0].mxu0
      %v1843 = vadd.f32 0.0, %v1842
      %v1844 = vpop.f32.mrb[0].mxu0
      %1845 = vmatprep.mubr.bf16.mxu0 0
      %1846 = vmatmul.mubr.bf16.gmra.mrb[0].mxu0 %v1707
      %v1847 = vpop.f32.mrb[0].mxu0
      %v1848 = vadd.f32 0.0, %v1847
      %v1849 = vpop.f32.mrb[0].mxu0
      %v1850 = vpop.f32.mrb[0].mxu0
      %v1851 = vadd.f32 0.0, %v1850
      %v1852 = vpop.f32.mrb[0].mxu0
      %1853 = vdwg.mxu0
      %v1854 = vadd.f32 %v1670, %v1792
      %v1855 = vadd.f32 %v1671, %v1795
      %v1856 = vadd.f32 %v1672, %v1800
      %v1857 = vadd.f32 %v1673, %v1803
      %v1858 = vadd.f32 %v1674, %v1808
      %v1859 = vadd.f32 %v1675, %v1811
      %v1860 = vadd.f32 %v1676, %v1816
      %v1861 = vadd.f32 %v1677, %v1819
      %v1862 = vadd.f32 %v1678, %v1824
      %v1863 = vadd.f32 %v1679, %v1827
      %v1864 = vadd.f32 %v1680, %v1832
      %v1865 = vadd.f32 %v1681, %v1835
      %v1866 = vadd.f32 %v1682, %v1840
      %v1867 = vadd.f32 %v1683, %v1843
      %v1868 = vadd.f32 %v1684, %v1848
      %v1869 = vadd.f32 %v1685, %v1851
      %v1871 = vshrl.u32 %v228, 16
      %v1873 = vrot.slane %v1871, 4
      %v1874 = vshll.u32 %v228, 16
      %v1876 = vrot.slane %v1874, 5
      %v1877 = vor.u32 %v1873, %v1876
      %v1878 = vrot.slane %v1877, 4
      %v1880 = vshll.u32 %v229, 16
      %v1882 = vrot.slane %v1880, 5
      %v1883 = vsel %vm249, %v1878, %v1882
      %v1884 = vshrl.u32 %v229, 16
      %v1886 = vrot.slane %v1884, 4
      %v1887 = vor.u32 %v1886, %v1882
      %v1888 = vrot.slane %v1887, 4
      %v1890 = vshll.u32 %v230, 16
      %v1892 = vrot.slane %v1890, 5
      %v1893 = vsel %vm249, %v1888, %v1892
      %s1894 = scalar_lea.vmem %s1, 448
      %v1895 = vld [vmem:[%s1894] sm:$0xf]
      %v1896 = vld [vmem:[%s1894 + $0x4] sm:$0xf]
      %v1897 = vld [vmem:[%s1894 + $0x8] sm:$0xf]
      %v1898 = vld [vmem:[%s1894 + $0xc] sm:$0xf]
      %v1899 = vld [vmem:[%s1894 + $0x10] sm:$0xf]
      %v1900 = vld [vmem:[%s1894 + $0x14] sm:$0xf]
      %v1901 = vld [vmem:[%s1894 + $0x18] sm:$0xf]
      %v1902 = vld [vmem:[%s1894 + $0x1c] sm:$0xf]
      %v1903 = vld [vmem:[%s1894 + $0x20] sm:$0xf]
      %v1904 = vld [vmem:[%s1894 + $0x24] sm:$0xf]
      %v1905 = vld [vmem:[%s1894 + $0x28] sm:$0xf]
      %v1906 = vld [vmem:[%s1894 + $0x2c] sm:$0xf]
      %v1907 = vld [vmem:[%s1894 + $0x30] sm:$0xf]
      %v1908 = vld [vmem:[%s1894 + $0x34] sm:$0xf]
      %v1909 = vld [vmem:[%s1894 + $0x38] sm:$0xf]
      %v1910 = vld [vmem:[%s1894 + $0x3c] sm:$0xf]
      %v1911 = vunpack.c.l.b16 %v1883
      %v1912 = vunpack.c.l.b16 %v1893
      %v1913 = vpack.c.b16 %v1912, %v1911
      %v1931 = vunpack.c.l.b16 %v1895
      %v1932 = vunpack.c.l.b16 %v1896
      %v1933 = vunpack.c.l.b16 %v1897
      %v1934 = vunpack.c.l.b16 %v1898
      %v1935 = vunpack.c.l.b16 %v1899
      %v1936 = vunpack.c.l.b16 %v1900
      %v1937 = vunpack.c.l.b16 %v1901
      %v1938 = vunpack.c.l.b16 %v1902
      %v1939 = vunpack.c.l.b16 %v1903
      %v1940 = vunpack.c.l.b16 %v1904
      %v1941 = vunpack.c.l.b16 %v1905
      %v1942 = vunpack.c.l.b16 %v1906
      %v1943 = vunpack.c.l.b16 %v1907
      %v1944 = vunpack.c.l.b16 %v1908
      %v1945 = vunpack.c.l.b16 %v1909
      %v1946 = vunpack.c.l.b16 %v1910
      %v1947 = vpack.c.b16 %v1932, %v1931
      %v1948 = vpack.c.b16 %v1934, %v1933
      %v1949 = vpack.c.b16 %v1936, %v1935
      %v1950 = vpack.c.b16 %v1938, %v1937
      %v1951 = vpack.c.b16 %v1940, %v1939
      %v1952 = vpack.c.b16 %v1942, %v1941
      %v1953 = vpack.c.b16 %v1944, %v1943
      %v1954 = vpack.c.b16 %v1946, %v1945
      %1963 = vmatprep.subr.bf16.mxu0 0
      %1964 = vmatpush1.bf16.msra.mxu0 %v1947
      %1965 = vmatprep.subr.bf16.mxu0 0
      %1966 = vmatpush1.bf16.msra.mxu0 %v1948
      %1967 = vmatprep.subr.bf16.mxu0 0
      %1968 = vmatpush1.bf16.msra.mxu0 %v1949
      %1969 = vmatprep.subr.bf16.mxu0 0
      %1970 = vmatpush1.bf16.msra.mxu0 %v1950
      %1971 = vmatprep.subr.bf16.mxu0 0
      %1972 = vmatpush1.bf16.msra.mxu0 %v1951
      %1973 = vmatprep.subr.bf16.mxu0 0
      %1974 = vmatpush1.bf16.msra.mxu0 %v1952
      %1975 = vmatprep.subr.bf16.mxu0 0
      %1976 = vmatpush1.bf16.msra.mxu0 %v1953
      %1977 = vmatprep.subr.bf16.mxu0 0
      %1978 = vmatpush1.bf16.msra.mxu0 %v1954
      %1979 = vmatprep.subr.bf16.mxu0 0
      %1980 = vmatpush1.bf16.msra.mxu0 0
      %1981 = vmatprep.subr.bf16.mxu0 0
      %1982 = vmatpush1.bf16.msra.mxu0 0
      %1983 = vmatprep.subr.bf16.mxu0 0
      %1984 = vmatpush1.bf16.msra.mxu0 0
      %1985 = vmatprep.subr.bf16.mxu0 0
      %1986 = vmatpush1.bf16.msra.mxu0 0
      %1987 = vmatprep.subr.bf16.mxu0 0
      %1988 = vmatpush1.bf16.msra.mxu0 0
      %1989 = vmatprep.subr.bf16.mxu0 0
      %1990 = vmatpush1.bf16.msra.mxu0 0
      %1991 = vmatprep.subr.bf16.mxu0 0
      %1992 = vmatpush1.bf16.msra.mxu0 0
      %1993 = vmatprep.subr.bf16.mxu0 0
      %1994 = vmatpush1.bf16.msra.mxu0 0
      %1995 = vmatprep.mubr.bf16.mxu0 0
      %1996 = vmatmul.mubr.bf16.gmra.mrb[0].mxu0 %v477
      %v1997 = vpop.f32.mrb[0].mxu0
      %v1998 = vadd.f32 0.0, %v1997
      %v1999 = vpop.f32.mrb[0].mxu0
      %v2000 = vpop.f32.mrb[0].mxu0
      %v2001 = vadd.f32 0.0, %v2000
      %v2002 = vpop.f32.mrb[0].mxu0
      %2003 = vmatprep.mubr.bf16.mxu0 0
      %2004 = vmatmul.mubr.bf16.gmra.mrb[0].mxu0 %v478
      %v2005 = vpop.f32.mrb[0].mxu0
      %v2006 = vadd.f32 0.0, %v2005
      %v2007 = vpop.f32.mrb[0].mxu0
      %v2008 = vpop.f32.mrb[0].mxu0
      %v2009 = vadd.f32 0.0, %v2008
      %v2010 = vpop.f32.mrb[0].mxu0
      %2011 = vmatprep.mubr.bf16.mxu0 0
      %2012 = vmatmul.mubr.bf16.gmra.mrb[0].mxu0 %v479
      %v2013 = vpop.f32.mrb[0].mxu0
      %v2014 = vadd.f32 0.0, %v2013
      %v2015 = vpop.f32.mrb[0].mxu0
      %v2016 = vpop.f32.mrb[0].mxu0
      %v2017 = vadd.f32 0.0, %v2016
      %v2018 = vpop.f32.mrb[0].mxu0
      %2019 = vmatprep.mubr.bf16.mxu0 0
      %2020 = vmatmul.mubr.bf16.gmra.mrb[0].mxu0 %v480
      %v2021 = vpop.f32.mrb[0].mxu0
      %v2022 = vadd.f32 0.0, %v2021
      %v2023 = vpop.f32.mrb[0].mxu0
      %v2024 = vpop.f32.mrb[0].mxu0
      %v2025 = vadd.f32 0.0, %v2024
      %v2026 = vpop.f32.mrb[0].mxu0
      %2027 = vmatprep.mubr.bf16.mxu0 0
      %2028 = vmatmul.mubr.bf16.gmra.mrb[0].mxu0 %v481
      %v2029 = vpop.f32.mrb[0].mxu0
      %v2030 = vadd.f32 0.0, %v2029
      %v2031 = vpop.f32.mrb[0].mxu0
      %v2032 = vpop.f32.mrb[0].mxu0
      %v2033 = vadd.f32 0.0, %v2032
      %v2034 = vpop.f32.mrb[0].mxu0
      %2035 = vmatprep.mubr.bf16.mxu0 0
      %2036 = vmatmul.mubr.bf16.gmra.mrb[0].mxu0 %v482
      %v2037 = vpop.f32.mrb[0].mxu0
      %v2038 = vadd.f32 0.0, %v2037
      %v2039 = vpop.f32.mrb[0].mxu0
      %v2040 = vpop.f32.mrb[0].mxu0
      %v2041 = vadd.f32 0.0, %v2040
      %v2042 = vpop.f32.mrb[0].mxu0
      %2043 = vmatprep.mubr.bf16.mxu0 0
      %2044 = vmatmul.mubr.bf16.gmra.mrb[0].mxu0 %v1333
      %v2045 = vpop.f32.mrb[0].mxu0
      %v2046 = vadd.f32 0.0, %v2045
      %v2047 = vpop.f32.mrb[0].mxu0
      %v2048 = vpop.f32.mrb[0].mxu0
      %v2049 = vadd.f32 0.0, %v2048
      %v2050 = vpop.f32.mrb[0].mxu0
      %2051 = vmatprep.mubr.bf16.mxu0 0
      %2052 = vmatmul.mubr.bf16.gmra.mrb[0].mxu0 %v1913
      %v2053 = vpop.f32.mrb[0].mxu0
      %v2054 = vadd.f32 0.0, %v2053
      %v2055 = vpop.f32.mrb[0].mxu0
      %v2056 = vpop.f32.mrb[0].mxu0
      %v2057 = vadd.f32 0.0, %v2056
      %v2058 = vpop.f32.mrb[0].mxu0
      %2059 = vdwg.mxu0
      %v2060 = vadd.f32 %v1854, %v1998
      %v2061 = vadd.f32 %v1855, %v2001
      %v2062 = vadd.f32 %v1856, %v2006
      %v2063 = vadd.f32 %v1857, %v2009
      %v2064 = vadd.f32 %v1858, %v2014
      %v2065 = vadd.f32 %v1859, %v2017
      %v2066 = vadd.f32 %v1860, %v2022
      %v2067 = vadd.f32 %v1861, %v2025
      %v2068 = vadd.f32 %v1862, %v2030
      %v2069 = vadd.f32 %v1863, %v2033
      %v2070 = vadd.f32 %v1864, %v2038
      %v2071 = vadd.f32 %v1865, %v2041
      %v2072 = vadd.f32 %v1866, %v2046
      %v2073 = vadd.f32 %v1867, %v2049
      %v2074 = vadd.f32 %v1868, %v2054
      %v2075 = vadd.f32 %v1869, %v2057
      %v2077 = vrot.slane %v228, 5
      %v2078 = vrot.slane %v2077, 4
      %v2079 = vrot.slane %v229, 5
      %v2080 = vsel %vm839, %v2078, %v2079
      %v2081 = vrot.slane %v2079, 4
      %v2082 = vrot.slane %v230, 5
      %v2083 = vsel %vm839, %v2081, %v2082
      %s2084 = scalar_lea.vmem %s1, 512
      %v2085 = vld [vmem:[%s2084] sm:$0xf]
      %v2086 = vld [vmem:[%s2084 + $0x4] sm:$0xf]
      %v2087 = vld [vmem:[%s2084 + $0x8] sm:$0xf]
      %v2088 = vld [vmem:[%s2084 + $0xc] sm:$0xf]
      %v2089 = vld [vmem:[%s2084 + $0x10] sm:$0xf]
      %v2090 = vld [vmem:[%s2084 + $0x14] sm:$0xf]
      %v2091 = vld [vmem:[%s2084 + $0x18] sm:$0xf]
      %v2092 = vld [vmem:[%s2084 + $0x1c] sm:$0xf]
      %v2093 = vld [vmem:[%s2084 + $0x20] sm:$0xf]
      %v2094 = vld [vmem:[%s2084 + $0x24] sm:$0xf]
      %v2095 = vld [vmem:[%s2084 + $0x28] sm:$0xf]
      %v2096 = vld [vmem:[%s2084 + $0x2c] sm:$0xf]
      %v2097 = vld [vmem:[%s2084 + $0x30] sm:$0xf]
      %v2098 = vld [vmem:[%s2084 + $0x34] sm:$0xf]
      %v2099 = vld [vmem:[%s2084 + $0x38] sm:$0xf]
      %v2100 = vld [vmem:[%s2084 + $0x3c] sm:$0xf]
      %v2101 = vunpack.c.l.b16 %v2080
      %v2102 = vunpack.c.l.b16 %v2083
      %v2103 = vpack.c.b16 %v2102, %v2101
      %v2121 = vunpack.c.l.b16 %v2085
      %v2122 = vunpack.c.l.b16 %v2086
      %v2123 = vunpack.c.l.b16 %v2087
      %v2124 = vunpack.c.l.b16 %v2088
      %v2125 = vunpack.c.l.b16 %v2089
      %v2126 = vunpack.c.l.b16 %v2090
      %v2127 = vunpack.c.l.b16 %v2091
      %v2128 = vunpack.c.l.b16 %v2092
      %v2129 = vunpack.c.l.b16 %v2093
      %v2130 = vunpack.c.l.b16 %v2094
      %v2131 = vunpack.c.l.b16 %v2095
      %v2132 = vunpack.c.l.b16 %v2096
      %v2133 = vunpack.c.l.b16 %v2097
      %v2134 = vunpack.c.l.b16 %v2098
      %v2135 = vunpack.c.l.b16 %v2099
      %v2136 = vunpack.c.l.b16 %v2100
      %v2137 = vpack.c.b16 %v2122, %v2121
      %v2138 = vpack.c.b16 %v2124, %v2123
      %v2139 = vpack.c.b16 %v2126, %v2125
      %v2140 = vpack.c.b16 %v2128, %v2127
      %v2141 = vpack.c.b16 %v2130, %v2129
      %v2142 = vpack.c.b16 %v2132, %v2131
      %v2143 = vpack.c.b16 %v2134, %v2133
      %v2144 = vpack.c.b16 %v2136, %v2135
      %2153 = vmatprep.subr.bf16.mxu0 0
      %2154 = vmatpush1.bf16.msra.mxu0 %v2137
      %2155 = vmatprep.subr.bf16.mxu0 0
      %2156 = vmatpush1.bf16.msra.mxu0 %v2138
      %2157 = vmatprep.subr.bf16.mxu0 0
      %2158 = vmatpush1.bf16.msra.mxu0 %v2139
      %2159 = vmatprep.subr.bf16.mxu0 0
      %2160 = vmatpush1.bf16.msra.mxu0 %v2140
      %2161 = vmatprep.subr.bf16.mxu0 0
      %2162 = vmatpush1.bf16.msra.mxu0 %v2141
      %2163 = vmatprep.subr.bf16.mxu0 0
      %2164 = vmatpush1.bf16.msra.mxu0 %v2142
      %2165 = vmatprep.subr.bf16.mxu0 0
      %2166 = vmatpush1.bf16.msra.mxu0 %v2143
      %2167 = vmatprep.subr.bf16.mxu0 0
      %2168 = vmatpush1.bf16.msra.mxu0 %v2144
      %2169 = vmatprep.subr.bf16.mxu0 0
      %2170 = vmatpush1.bf16.msra.mxu0 0
      %2171 = vmatprep.subr.bf16.mxu0 0
      %2172 = vmatpush1.bf16.msra.mxu0 0
      %2173 = vmatprep.subr.bf16.mxu0 0
      %2174 = vmatpush1.bf16.msra.mxu0 0
      %2175 = vmatprep.subr.bf16.mxu0 0
      %2176 = vmatpush1.bf16.msra.mxu0 0
      %2177 = vmatprep.subr.bf16.mxu0 0
      %2178 = vmatpush1.bf16.msra.mxu0 0
      %2179 = vmatprep.subr.bf16.mxu0 0
      %2180 = vmatpush1.bf16.msra.mxu0 0
      %2181 = vmatprep.subr.bf16.mxu0 0
      %2182 = vmatpush1.bf16.msra.mxu0 0
      %2183 = vmatprep.subr.bf16.mxu0 0
      %2184 = vmatpush1.bf16.msra.mxu0 0
      %2185 = vmatprep.mubr.bf16.mxu0 0
      %2186 = vmatmul.mubr.bf16.gmra.mrb[0].mxu0 %v931
      %v2187 = vpop.f32.mrb[0].mxu0
      %v2188 = vadd.f32 0.0, %v2187
      %v2189 = vpop.f32.mrb[0].mxu0
      %v2190 = vpop.f32.mrb[0].mxu0
      %v2191 = vadd.f32 0.0, %v2190
      %v2192 = vpop.f32.mrb[0].mxu0
      %2193 = vmatprep.mubr.bf16.mxu0 0
      %2194 = vmatmul.mubr.bf16.gmra.mrb[0].mxu0 %v932
      %v2195 = vpop.f32.mrb[0].mxu0
      %v2196 = vadd.f32 0.0, %v2195
      %v2197 = vpop.f32.mrb[0].mxu0
      %v2198 = vpop.f32.mrb[0].mxu0
      %v2199 = vadd.f32 0.0, %v2198
      %v2200 = vpop.f32.mrb[0].mxu0
      %2201 = vmatprep.mubr.bf16.mxu0 0
      %2202 = vmatmul.mubr.bf16.gmra.mrb[0].mxu0 %v933
      %v2203 = vpop.f32.mrb[0].mxu0
      %v2204 = vadd.f32 0.0, %v2203
      %v2205 = vpop.f32.mrb[0].mxu0
      %v2206 = vpop.f32.mrb[0].mxu0
      %v2207 = vadd.f32 0.0, %v2206
      %v2208 = vpop.f32.mrb[0].mxu0
      %2209 = vmatprep.mubr.bf16.mxu0 0
      %2210 = vmatmul.mubr.bf16.gmra.mrb[0].mxu0 %v934
      %v2211 = vpop.f32.mrb[0].mxu0
      %v2212 = vadd.f32 0.0, %v2211
      %v2213 = vpop.f32.mrb[0].mxu0
      %v2214 = vpop.f32.mrb[0].mxu0
      %v2215 = vadd.f32 0.0, %v2214
      %v2216 = vpop.f32.mrb[0].mxu0
      %2217 = vmatprep.mubr.bf16.mxu0 0
      %2218 = vmatmul.mubr.bf16.gmra.mrb[0].mxu0 %v935
      %v2219 = vpop.f32.mrb[0].mxu0
      %v2220 = vadd.f32 0.0, %v2219
      %v2221 = vpop.f32.mrb[0].mxu0
      %v2222 = vpop.f32.mrb[0].mxu0
      %v2223 = vadd.f32 0.0, %v2222
      %v2224 = vpop.f32.mrb[0].mxu0
      %2225 = vmatprep.mubr.bf16.mxu0 0
      %2226 = vmatmul.mubr.bf16.gmra.mrb[0].mxu0 %v936
      %v2227 = vpop.f32.mrb[0].mxu0
      %v2228 = vadd.f32 0.0, %v2227
      %v2229 = vpop.f32.mrb[0].mxu0
      %v2230 = vpop.f32.mrb[0].mxu0
      %v2231 = vadd.f32 0.0, %v2230
      %v2232 = vpop.f32.mrb[0].mxu0
      %2233 = vmatprep.mubr.bf16.mxu0 0
      %2234 = vmatmul.mubr.bf16.gmra.mrb[0].mxu0 %v1523
      %v2235 = vpop.f32.mrb[0].mxu0
      %v2236 = vadd.f32 0.0, %v2235
      %v2237 = vpop.f32.mrb[0].mxu0
      %v2238 = vpop.f32.mrb[0].mxu0
      %v2239 = vadd.f32 0.0, %v2238
      %v2240 = vpop.f32.mrb[0].mxu0
      %2241 = vmatprep.mubr.bf16.mxu0 0
      %2242 = vmatmul.mubr.bf16.gmra.mrb[0].mxu0 %v2103
      %v2243 = vpop.f32.mrb[0].mxu0
      %v2244 = vadd.f32 0.0, %v2243
      %v2245 = vpop.f32.mrb[0].mxu0
      %v2246 = vpop.f32.mrb[0].mxu0
      %v2247 = vadd.f32 0.0, %v2246
      %v2248 = vpop.f32.mrb[0].mxu0
      %2249 = vdwg.mxu0
      %v2250 = vadd.f32 %v2060, %v2188
      %v2251 = vadd.f32 %v2061, %v2191
      %v2252 = vadd.f32 %v2062, %v2196
      %v2253 = vadd.f32 %v2063, %v2199
      %v2254 = vadd.f32 %v2064, %v2204
      %v2255 = vadd.f32 %v2065, %v2207
      %v2256 = vadd.f32 %v2066, %v2212
      %v2257 = vadd.f32 %v2067, %v2215
      %v2258 = vadd.f32 %v2068, %v2220
      %v2259 = vadd.f32 %v2069, %v2223
      %v2260 = vadd.f32 %v2070, %v2228
      %v2261 = vadd.f32 %v2071, %v2231
      %v2262 = vadd.f32 %v2072, %v2236
      %v2263 = vadd.f32 %v2073, %v2239
      %v2264 = vadd.f32 %v2074, %v2244
      %v2265 = vadd.f32 %v2075, %v2247
      %v2266 = vld [vmem:[%s2] sm:$0x1]
      %v2268 = vlaneseq
      %v2269 = vshrl.u32 %v2268, 7
      %v2270 = vsub.s32 0, %v2269
      %v2271 = vrot.slane %v2266, %v2270
      %v2273 = vadd.f32 %v2250, %v2271
      %v2274 = vadd.f32 %v2251, %v2271
      %v2275 = vadd.f32 %v2252, %v2271
      %v2276 = vadd.f32 %v2253, %v2271
      %v2277 = vadd.f32 %v2254, %v2271
      %v2278 = vadd.f32 %v2255, %v2271
      %v2279 = vadd.f32 %v2256, %v2271
      %v2280 = vadd.f32 %v2257, %v2271
      %v2281 = vadd.f32 %v2258, %v2271
      %v2282 = vadd.f32 %v2259, %v2271
      %v2283 = vadd.f32 %v2260, %v2271
      %v2284 = vadd.f32 %v2261, %v2271
      %v2285 = vadd.f32 %v2262, %v2271
      %v2286 = vadd.f32 %v2263, %v2271
      %v2287 = vadd.f32 %v2264, %v2271
      %v2288 = vadd.f32 %v2265, %v2271
      %v2289 = vmax.f32 %v2273, 0.0
      %v2290 = vmax.f32 %v2274, 0.0
      %v2291 = vmax.f32 %v2275, 0.0
      %v2292 = vmax.f32 %v2276, 0.0
      %v2293 = vmax.f32 %v2277, 0.0
      %v2294 = vmax.f32 %v2278, 0.0
      %v2295 = vmax.f32 %v2279, 0.0
      %v2296 = vmax.f32 %v2280, 0.0
      %v2297 = vmax.f32 %v2281, 0.0
      %v2298 = vmax.f32 %v2282, 0.0
      %v2299 = vmax.f32 %v2283, 0.0
      %v2300 = vmax.f32 %v2284, 0.0
      %v2301 = vmax.f32 %v2285, 0.0
      %v2302 = vmax.f32 %v2286, 0.0
      %v2303 = vmax.f32 %v2287, 0.0
      %v2304 = vmax.f32 %v2288, 0.0
      %2305 = vst [vmem:[%s194] sm:$0xff] %v2289
      %2306 = vst [vmem:[%s194 + $0x8] sm:$0xff] %v2290
      %2307 = vst [vmem:[%s194 + $0x10] sm:$0xff] %v2291
      %2308 = vst [vmem:[%s194 + $0x18] sm:$0xff] %v2292
      %2309 = vst [vmem:[%s194 + $0x20] sm:$0xff] %v2293
      %2310 = vst [vmem:[%s194 + $0x28] sm:$0xff] %v2294
      %2311 = vst [vmem:[%s194 + $0x30] sm:$0xff] %v2295
      %2312 = vst [vmem:[%s194 + $0x38] sm:$0xff] %v2296
      %2313 = vst [vmem:[%s194 + $0x40] sm:$0xff] %v2297
      %2314 = vst [vmem:[%s194 + $0x48] sm:$0xff] %v2298
      %2315 = vst [vmem:[%s194 + $0x50] sm:$0xff] %v2299
      %2316 = vst [vmem:[%s194 + $0x58] sm:$0xff] %v2300
      %2317 = vst [vmem:[%s194 + $0x60] sm:$0xff] %v2301
      %2318 = vst [vmem:[%s194 + $0x68] sm:$0xff] %v2302
      %2319 = vst [vmem:[%s194 + $0x70] sm:$0xff] %v2303
      %2320 = vst [vmem:[%s194 + $0x78] sm:$0xff] %v2304
      %s2321 = smul.u32 8, %s19
      %p2322 = scmp.lt.s32.totalorder %s18, 1
      %s2323 = scalar_select %p2322, %s18, 1
      %p2324 = scmp.lt.s32.totalorder %s2321, 15
      %s2325 = scalar_select %p2324, %s2321, 15
      %s2326 = smul.addr %s2325, 2
      %s2327 = smul.addr %s2323, 32
      %s2328 = sadd.s32 %s2326, %s2327
      %s2329 = smul.addr %s2328, 8
      %s2330 = scalar_lea.vmem %s3, %s2329
      // Predicated region
      $region33: #{conv_bn_forward.1} parent=31 // pred_check
        %p2331 = pneg %p114
      $region34: #{conv_bn_forward.1} parent=31 // pred_check_branch
        %2333 = sbr.rel (%p2331) target = $region36
      $region35: #{conv_bn_forward.1} parent=31 // pred_region
        %s2334 = smul.u32 8, %s19
      $region36: #{conv_bn_forward.1} parent=31 // pred_fallthru
        _
    $region32: #{conv_bn_forward.1} parent=5 // pred_fallthru
      _
    %p2335 = scmp.le.s32.totalorder 2, %s9
    // Predicated region
    $region37: #{conv_bn_forward.1} parent=5 // pred_check
      %p2336 = pneg %p2335
    $region38: #{conv_bn_forward.1} parent=5 // pred_check_branch
      %2338 = sbr.rel (%p2336) target = $region40
    $region39: #{conv_bn_forward.1} parent=5 // pred_region
      %s2339 = ssub.s32 %s9, 2
      // Predicated region
      $region41: #{conv_bn_forward.1} parent=39 // pred_check
        %p2340 = pneg %p120
      $region42: #{conv_bn_forward.1} parent=39 // pred_check_branch
        %2342 = sbr.rel (%p2340) target = $region44
      $region43: #{conv_bn_forward.1} parent=39 // pred_region
        %s2343 = smul.u32 8, %s21
        %p2344 = scmp.lt.s32.totalorder %s20, 1
        %s2345 = scalar_select %p2344, %s20, 1
        %p2346 = scmp.lt.s32.totalorder %s2343, 15
        %s2347 = scalar_select %p2346, %s2343, 15
        %s2348 = smul.addr %s2347, 2
        %s2349 = smul.addr %s2345, 32
        %s2350 = sadd.s32 %s2348, %s2349
        %s2351 = smul.addr %s2350, 8
        %s2352 = scalar_lea.vmem %s3, %s2351
      $region44: #{conv_bn_forward.1} parent=39 // pred_fallthru
        _
    $region40: #{conv_bn_forward.1} parent=5 // pred_fallthru
      _
  $region6: #{conv_bn_forward.1} parent=0 // loop_footer
    %s13 = sadd.s32 1, %s9
  $region7: #{conv_bn_forward.1} parent=0 // loop_footer_branch
    %8 = sbr.rel target = $region3
  $region8: #{conv_bn_forward.1} parent=0 // loop_exit
    _

</llo_original>
